<compile_context>
chip_gen: v6e
topology: v6e:2x2x1
jax: 0.10.0
libtpu: 0.0.40
codegen_flags: <defaults>
</compile_context>

<pallas_src>
import jax
import jax.numpy as jnp
from jax.experimental import pallas as pl
from jax.experimental.pallas import tpu as pltpu


def _round_up(x, m):
    return ((x + m - 1) // m) * m


def _chamfer_kernel(pred_ref, gt_ref, d1_ref, d2_ref):
    # pred_ref: (1, TN, 3)    pred tile   (points on sublanes, xyz on lanes)
    # gt_ref:   (1, 3, TM)    gt tile     (xyz on sublanes, points on lanes)
    # d1_ref:   (1, TN, 1)    per-(b, ni) block, resident across the inner mj axis
    # d2_ref:   (1, 1, M_pad) per-b lane-dense slab, resident across the whole (ni, mj) loop
    ni = pl.program_id(1)
    mj = pl.program_id(2)
    tn = pred_ref.shape[1]
    tm = gt_ref.shape[2]

    p = pred_ref[0]                                   # (TN, 3)
    g = gt_ref[0]                                     # (3, TM)

    # Pairwise squared distances, MXU-free: sum_k (p_k - g_k)^2 via broadcast VPU passes.
    dx = p[:, 0:1] - g[0:1, :]                        # (TN, TM)
    dy = p[:, 1:2] - g[1:2, :]
    dz = p[:, 2:3] - g[2:3, :]
    d = dx * dx + dy * dy + dz * dz                   # (TN, TM)

    row_min = jnp.min(d, axis=1, keepdims=True)       # (TN, 1): pred -> gt partial min
    col_min = jnp.min(d, axis=0, keepdims=True)       # (1, TM): gt -> pred partial min

    # --- dist1: min over gt tiles, accumulated in the mj-resident output block ---
    # TODO(synk): a fully lane-dense (B, 1, N_pad) dist1 output would need an in-kernel
    # (TN,1)->(1,TN) transpose; kept sublane-major to stay on well-trodden lowering paths
    # (with 512x512 tiles the narrow stores are <10% of a step and the HBM write is
    # contiguous anyway).
    @pl.when(mj == 0)
    def _():
        d1_ref[...] = row_min.reshape(1, tn, 1)

    @pl.when(mj > 0)
    def _():
        d1_ref[...] = jnp.minimum(d1_ref[...], row_min.reshape(1, tn, 1))

    # --- dist2: min over pred tiles, accumulated into the lane-dense per-batch slab ---
    m_off = pl.multiple_of(mj * tm, tm)

    @pl.when(ni == 0)
    def _():
        d2_ref[:, :, pl.ds(m_off, tm)] = col_min.reshape(1, 1, tm)

    @pl.when(ni > 0)
    def _():
        cur = d2_ref[:, :, pl.ds(m_off, tm)]
        d2_ref[:, :, pl.ds(m_off, tm)] = jnp.minimum(cur, col_min.reshape(1, 1, tm))


def chamfer_distance_l2(prediction, gt, compress="mean", *, tn=512, tm=512):
    """ChamferDistanceL2.forward.  prediction: (B, N, 3), gt: (B, M, 3)."""
    pred = jnp.asarray(prediction, jnp.float32)
    gt_pts = jnp.asarray(gt, jnp.float32)
    b, n, dim = pred.shape
    b2, m, dim2 = gt_pts.shape
    if b != b2 or dim != 3 or dim2 != 3:
        raise ValueError("expected prediction (B, N, 3) and gt (B, M, 3)")
    if tn % 128 or tm % 128:
        raise ValueError("tile sizes must be multiples of 128")

    # Clamp tiles for small clouds, keeping them multiples of the 128-lane width.
    tn = min(tn, _round_up(n, 128))
    tm = min(tm, _round_up(m, 128))
    n_pad = _round_up(n, tn)
    m_pad = _round_up(m, tm)
    n_tiles = n_pad // tn
    m_tiles = m_pad // tm

    # Edge-replicate padding: padded entries duplicate a real point, so they can never
    # change a min; their own output entries are sliced off below.  No in-kernel masks.
    if n_pad != n:
        pred = jnp.pad(pred, ((0, 0), (0, n_pad - n), (0, 0)), mode="edge")
    gt_t = jnp.transpose(gt_pts, (0, 2, 1))                     # (B, 3, M): points on lanes
    if m_pad != m:
        gt_t = jnp.pad(gt_t, ((0, 0), (0, 0), (0, m_pad - m)), mode="edge")

    d1, d2 = pl.pallas_call(
        _chamfer_kernel,
        out_shape=[
            jax.ShapeDtypeStruct((b, n_pad, 1), jnp.float32),   # dist1 (padded)
            jax.ShapeDtypeStruct((b, 1, m_pad), jnp.float32),   # dist2 (padded, lane-dense)
        ],
        grid_spec=pltpu.PrefetchScalarGridSpec(
            num_scalar_prefetch=0,
            grid=(b, n_tiles, m_tiles),
            in_specs=[
                pl.BlockSpec((1, tn, 3), lambda bi, i, j: (bi, i, 0)),
                pl.BlockSpec((1, 3, tm), lambda bi, i, j: (bi, 0, j)),
            ],
            out_specs=[
                pl.BlockSpec((1, tn, 1), lambda bi, i, j: (bi, i, 0)),
                pl.BlockSpec((1, 1, m_pad), lambda bi, i, j: (bi, 0, 0)),
            ],
        ),
        compiler_params=pltpu.CompilerParams(
            dimension_semantics=("parallel", "arbitrary", "arbitrary"),
            vmem_limit_bytes=48 * 1024 * 1024),
        cost_estimate=pl.CostEstimate(
            flops=9 * b * n_pad * m_pad,
            transcendentals=0,
            bytes_accessed=4 * b * (3 * n_pad               # pred read once
                                    + 3 * m_pad * n_tiles   # gt re-read per pred row tile
                                    + n_pad + m_pad)),      # outputs
    )(pred, gt_t)

    dist1 = d1[:, :n, 0]    # (B, N)
    dist2 = d2[:, 0, :m]    # (B, M)

    if compress == "mean":
        return jnp.mean(dist1) + jnp.mean(dist2)
    elif compress == "list":
        return jnp.mean(dist1, axis=1) + jnp.mean(dist2, axis=1)
    raise ValueError(f"unknown compress mode: {compress!r}")


def _reference_chamfer(pred, gt_pts, compress):
    diff = pred[:, :, None, :] - gt_pts[:, None, :, :]          # (B, N, M, 3)
    d = jnp.sum(diff * diff, axis=-1)
    dist1 = jnp.min(d, axis=2)
    dist2 = jnp.min(d, axis=1)
    if compress == "mean":
        return jnp.mean(dist1) + jnp.mean(dist2)
    return jnp.mean(dist1, axis=1) + jnp.mean(dist2, axis=1)


if __name__ == "__main__":
    key = jax.random.PRNGKey(0)
    k1, k2, k3, k4 = jax.random.split(key, 4)

    chamfer = jax.jit(chamfer_distance_l2, static_argnames=("compress", "tn", "tm"))

    # Case 1: ragged point counts (exercises edge-replication padding), default big tiles.
    B, N, M = 2, 200, 152
    pred = jax.random.uniform(k1, (B, N, 3), jnp.float32)
    gt_pts = jax.random.uniform(k2, (B, M, 3), jnp.float32)

    loss_mean = jax.block_until_ready(chamfer(pred, gt_pts, compress="mean"))
    loss_list = jax.block_until_ready(chamfer(pred, gt_pts, compress="list"))
    ref_mean = _reference_chamfer(pred, gt_pts, "mean")
    ref_list = _reference_chamfer(pred, gt_pts, "list")

    assert loss_mean.shape == ()
    assert loss_list.shape == (B,)
    assert bool(jnp.isfinite(loss_mean))
    assert bool(jnp.all(jnp.isfinite(loss_list)))
    assert jnp.allclose(loss_mean, ref_mean, atol=1e-5, rtol=1e-4), (loss_mean, ref_mean)
    assert jnp.allclose(loss_list, ref_list, atol=1e-5, rtol=1e-4), (loss_list, ref_list)

    # Case 2: same data with small explicit tiles -> multi-tile grid on both axes,
    # exercising the mj>0 / ni>0 accumulation paths.
    loss_mt = jax.block_until_ready(chamfer(pred, gt_pts, compress="mean", tn=128, tm=128))
    assert jnp.allclose(loss_mt, ref_mean, atol=1e-5, rtol=1e-4), (loss_mt, ref_mean)

    # Case 3: point counts that exactly tile (no-padding fast path).
    B2, N2, M2 = 2, 256, 128
    pred2 = jax.random.uniform(k3, (B2, N2, 3), jnp.float32)
    gt2 = jax.random.uniform(k4, (B2, M2, 3), jnp.float32)
    loss2 = jax.block_until_ready(chamfer(pred2, gt2, compress="mean"))
    ref2 = _reference_chamfer(pred2, gt2, "mean")
    assert jnp.allclose(loss2, ref2, atol=1e-5, rtol=1e-4), (loss2, ref2)

    print("KERNEL_OK")
</pallas_src>

<mosaic_0001>
module attributes {stable_mosaic.version = 11 : i64} {
  func.func @_chamfer_kernel(%arg0: i32, %arg1: i32, %arg2: i32, %arg3: memref<1x256x3xf32, #tpu.memory_space<vmem>>, %arg4: memref<1x3x256xf32, #tpu.memory_space<vmem>>, %arg5: memref<1x256x1xf32, #tpu.memory_space<vmem>>, %arg6: memref<1x1x256xf32, #tpu.memory_space<vmem>>) attributes {dimension_semantics = [#tpu.dimension_semantics<parallel>, #tpu.dimension_semantics<arbitrary>, #tpu.dimension_semantics<arbitrary>], iteration_bounds = array<i64: 2, 1, 1>, scalar_prefetch = 0 : i64, scratch_operands = 0 : i64, tpu.core_type = #tpu.core_type<tc>, window_params = [{transform_indices = @transform_0, window_bounds = array<i64: 1, 256, 3>}, {transform_indices = @transform_1, window_bounds = array<i64: 1, 3, 256>}, {transform_indices = @transform_2, window_bounds = array<i64: 1, 256, 1>}, {transform_indices = @transform_3, window_bounds = array<i64: 1, 1, 256>}]} {
    %c0 = arith.constant 0 : index
    %c0_0 = arith.constant 0 : index
    %c0_1 = arith.constant 0 : index
    %0 = vector.load %arg3[%c0, %c0_0, %c0_1] : memref<1x256x3xf32, #tpu.memory_space<vmem>>, vector<1x256x3xf32>
    %1 = vector.shape_cast %0 : vector<1x256x3xf32> to vector<256x3xf32>
    %c0_2 = arith.constant 0 : index
    %c0_3 = arith.constant 0 : index
    %c0_4 = arith.constant 0 : index
    %2 = vector.load %arg4[%c0_2, %c0_3, %c0_4] : memref<1x3x256xf32, #tpu.memory_space<vmem>>, vector<1x3x256xf32>
    %3 = vector.shape_cast %2 : vector<1x3x256xf32> to vector<3x256xf32>
    %4 = vector.extract_strided_slice %1 {offsets = [0, 0], sizes = [256, 1], strides = [1, 1]} : vector<256x3xf32> to vector<256x1xf32>
    %5 = vector.extract_strided_slice %3 {offsets = [0, 0], sizes = [1, 256], strides = [1, 1]} : vector<3x256xf32> to vector<1x256xf32>
    %6 = vector.broadcast %4 : vector<256x1xf32> to vector<256x256xf32>
    %7 = vector.broadcast %5 : vector<1x256xf32> to vector<256x256xf32>
    %8 = arith.subf %6, %7 : vector<256x256xf32>
    %9 = vector.extract_strided_slice %1 {offsets = [0, 1], sizes = [256, 1], strides = [1, 1]} : vector<256x3xf32> to vector<256x1xf32>
    %10 = vector.extract_strided_slice %3 {offsets = [1, 0], sizes = [1, 256], strides = [1, 1]} : vector<3x256xf32> to vector<1x256xf32>
    %11 = vector.broadcast %9 : vector<256x1xf32> to vector<256x256xf32>
    %12 = vector.broadcast %10 : vector<1x256xf32> to vector<256x256xf32>
    %13 = arith.subf %11, %12 : vector<256x256xf32>
    %14 = vector.extract_strided_slice %1 {offsets = [0, 2], sizes = [256, 1], strides = [1, 1]} : vector<256x3xf32> to vector<256x1xf32>
    %15 = vector.extract_strided_slice %3 {offsets = [2, 0], sizes = [1, 256], strides = [1, 1]} : vector<3x256xf32> to vector<1x256xf32>
    %16 = vector.broadcast %14 : vector<256x1xf32> to vector<256x256xf32>
    %17 = vector.broadcast %15 : vector<1x256xf32> to vector<256x256xf32>
    %18 = arith.subf %16, %17 : vector<256x256xf32>
    %19 = arith.mulf %8, %8 : vector<256x256xf32>
    %20 = arith.mulf %13, %13 : vector<256x256xf32>
    %21 = arith.addf %19, %20 : vector<256x256xf32>
    %22 = arith.mulf %18, %18 : vector<256x256xf32>
    %23 = arith.addf %21, %22 : vector<256x256xf32>
    %cst = arith.constant dense<0x7F800000> : vector<256xf32>
    %24 = vector.multi_reduction <minimumf>, %23, %cst [1] : vector<256x256xf32> to vector<256xf32>
    %25 = vector.shape_cast %24 : vector<256xf32> to vector<256x1xf32>
    %cst_5 = arith.constant dense<0x7F800000> : vector<256xf32>
    %26 = vector.multi_reduction <minimumf>, %23, %cst_5 [0] : vector<256x256xf32> to vector<256xf32>
    %27 = vector.shape_cast %26 : vector<256xf32> to vector<1x256xf32>
    %c0_i32 = arith.constant 0 : i32
    %28 = arith.cmpi eq, %arg2, %c0_i32 : i32
    %29 = arith.extui %28 : i1 to i32
    %c0_i32_6 = arith.constant 0 : i32
    %30 = arith.cmpi ne, %29, %c0_i32_6 : i32
    scf.if %30 {
      %42 = vector.shape_cast %25 : vector<256x1xf32> to vector<1x256x1xf32>
      %c0_13 = arith.constant 0 : index
      %c0_14 = arith.constant 0 : index
      %c0_15 = arith.constant 0 : index
      %43 = vector.load %arg5[%c0_13, %c0_14, %c0_15] : memref<1x256x1xf32, #tpu.memory_space<vmem>>, vector<1x256x1xf32>
      tpu.vector_store %arg5[%c0_13, %c0_14, %c0_15], %42 {strides = array<i32>} : memref<1x256x1xf32, #tpu.memory_space<vmem>>, vector<1x256x1xf32>,
    } else {
    }
    %c0_i32_7 = arith.constant 0 : i32
    %31 = arith.cmpi sgt, %arg2, %c0_i32_7 : i32
    %32 = arith.extui %31 : i1 to i32
    %c0_i32_8 = arith.constant 0 : i32
    %33 = arith.cmpi ne, %32, %c0_i32_8 : i32
    scf.if %33 {
      %c0_13 = arith.constant 0 : index
      %c0_14 = arith.constant 0 : index
      %c0_15 = arith.constant 0 : index
      %42 = vector.load %arg5[%c0_13, %c0_14, %c0_15] : memref<1x256x1xf32, #tpu.memory_space<vmem>>, vector<1x256x1xf32>
      %43 = vector.shape_cast %25 : vector<256x1xf32> to vector<1x256x1xf32>
      %44 = arith.minimumf %42, %43 : vector<1x256x1xf32>
      %c0_16 = arith.constant 0 : index
      %c0_17 = arith.constant 0 : index
      %c0_18 = arith.constant 0 : index
      %45 = vector.load %arg5[%c0_16, %c0_17, %c0_18] : memref<1x256x1xf32, #tpu.memory_space<vmem>>, vector<1x256x1xf32>
      tpu.vector_store %arg5[%c0_16, %c0_17, %c0_18], %44 {strides = array<i32>} : memref<1x256x1xf32, #tpu.memory_space<vmem>>, vector<1x256x1xf32>,
    } else {
    }
    %c256_i32 = arith.constant 256 : i32
    %34 = arith.muli %arg2, %c256_i32 : i32
    %35 = tpu.assume_multiple %34, 256 : i32
    %c0_i32_9 = arith.constant 0 : i32
    %36 = arith.cmpi eq, %arg1, %c0_i32_9 : i32
    %37 = arith.extui %36 : i1 to i32
    %c0_i32_10 = arith.constant 0 : i32
    %38 = arith.cmpi ne, %37, %c0_i32_10 : i32
    scf.if %38 {
      %42 = vector.shape_cast %27 : vector<1x256xf32> to vector<1x1x256xf32>
      %c0_13 = arith.constant 0 : index
      %c0_14 = arith.constant 0 : index
      %43 = arith.index_cast %35 : i32 to index
      %44 = vector.load %arg6[%c0_13, %c0_14, %43] : memref<1x1x256xf32, #tpu.memory_space<vmem>>, vector<1x1x256xf32>
      tpu.vector_store %arg6[%c0_13, %c0_14, %43], %42 {strides = array<i32>} : memref<1x1x256xf32, #tpu.memory_space<vmem>>, vector<1x1x256xf32>,
    } else {
    }
    %c0_i32_11 = arith.constant 0 : i32
    %39 = arith.cmpi sgt, %arg1, %c0_i32_11 : i32
    %40 = arith.extui %39 : i1 to i32
    %c0_i32_12 = arith.constant 0 : i32
    %41 = arith.cmpi ne, %40, %c0_i32_12 : i32
    scf.if %41 {
      %c0_13 = arith.constant 0 : index
      %c0_14 = arith.constant 0 : index
      %42 = arith.index_cast %35 : i32 to index
      %43 = vector.load %arg6[%c0_13, %c0_14, %42] : memref<1x1x256xf32, #tpu.memory_space<vmem>>, vector<1x1x256xf32>
      %44 = vector.shape_cast %27 : vector<1x256xf32> to vector<1x1x256xf32>
      %45 = arith.minimumf %43, %44 : vector<1x1x256xf32>
      %c0_15 = arith.constant 0 : index
      %c0_16 = arith.constant 0 : index
      %46 = arith.index_cast %35 : i32 to index
      %47 = vector.load %arg6[%c0_15, %c0_16, %46] : memref<1x1x256xf32, #tpu.memory_space<vmem>>, vector<1x1x256xf32>
      tpu.vector_store %arg6[%c0_15, %c0_16, %46], %45 {strides = array<i32>} : memref<1x1x256xf32, #tpu.memory_space<vmem>>, vector<1x1x256xf32>,
    } else {
    }
    return
  }
  func.func @transform_0(%arg0: i32, %arg1: i32, %arg2: i32) -> (i32, i32, i32) {
    %c0_i32 = arith.constant 0 : i32
    %c0_i32_0 = arith.constant 0 : i32
    return %arg0, %arg1, %c0_i32 : i32, i32, i32
  }
  func.func @transform_1(%arg0: i32, %arg1: i32, %arg2: i32) -> (i32, i32, i32) {
    %c0_i32 = arith.constant 0 : i32
    %c0_i32_0 = arith.constant 0 : i32
    return %arg0, %c0_i32, %arg2 : i32, i32, i32
  }
  func.func @transform_2(%arg0: i32, %arg1: i32, %arg2: i32) -> (i32, i32, i32) {
    %c0_i32 = arith.constant 0 : i32
    %c0_i32_0 = arith.constant 0 : i32
    return %arg0, %arg1, %c0_i32 : i32, i32, i32
  }
  func.func @transform_3(%arg0: i32, %arg1: i32, %arg2: i32) -> (i32, i32, i32) {
    %c0_i32 = arith.constant 0 : i32
    %c0_i32_0 = arith.constant 0 : i32
    %c0_i32_1 = arith.constant 0 : i32
    return %arg0, %c0_i32, %c0_i32_0 : i32, i32, i32
  }
}

</mosaic_0001>

<llo_original>
// kernel: chamfer_distance_l2.1
$region0: #{chamfer_distance_l2.1}
  #allocation0 [shape = 'u32[]', space=smem, size = 0x4, offset = 0x4, fixed_abs, tag = 'smem constant byte address 0x4 - core index']
  #allocation1 [shape = 'u32[144,128]{1,0:T(1,128)}', space=vmem, size = 0x12000, scoped, tag = 'internal scratch']
  %s0 = inlined_call_operand.vmem [shape: f32[2,256,3], index: 0, kind: input, shape index: {}]
  %s1 = inlined_call_operand.vmem [shape: f32[2,3,256], index: 1, kind: input, shape index: {}]
  %s2 = inlined_call_operand.vmem [shape: f32[2,256,1], index: 2, kind: output, shape index: {0}]
  %s3 = inlined_call_operand.vmem [shape: f32[2,1,256], index: 3, kind: output, shape index: {1}]
  %4 = xla_tuple %s2, %s3
  %s5 = sld [smem:[#allocation0]]
  $region65: #{chamfer_distance_l2.1} parent=0
    _
  %s7 = ssub.s32 1, %s5
  %s8 = scalar_select 0, %s7, %s5
  loop: start=0, step=1, limit=4
  $region2: #{chamfer_distance_l2.1} parent=0 // loop_pre_header
    _
  $region3: #{chamfer_distance_l2.1} parent=0 // loop_header
    %s10 = sphi 0, %s14
    %p11 = scmp.ge.s32.totalorder %s10, 4
    %s17 = sphi 0, %s36
    %s18 = sphi 0, %s32
    %s19 = sphi 0, %s28
    %s20 = sphi 0, %s17
    %s21 = sphi 0, %s18
    %s22 = sphi 0, %s19
    %s23 = sphi 0, %s20
    %s24 = sphi 0, %s21
    %s25 = sphi 0, %s22
    %s41 = sphi 0, %s43
    %s44 = sphi 0, %s41
    %s45 = sphi 0, %s44
    %s61 = sphi 0, %s45
    %s69 = sphi 0, %s71
    %s72 = sphi 0, %s69
    %s73 = sphi 0, %s72
    %s89 = sphi 0, %s73
    %s97 = sphi 0, %s99
    %s100 = sphi 0, %s97
    %s101 = sphi 0, %s100
    %s117 = sphi 0, %s101
    %s123 = sphi 0, %s125
    %s126 = sphi 0, %s123
    %s127 = sphi 0, %s126
    %s143 = sphi 0, %s127
  $region4: #{chamfer_distance_l2.1} parent=0 // loop_header_branch
    %13 = sbr.rel (%p11) target = $region8
  $region5: #{chamfer_distance_l2.1} parent=0 // loop_body
    %s15 = ssub.s32 %s10, 1
    %s16 = ssub.s32 %s10, 2
    %s26 = sadd.s32 1, %s19
    %p27 = scmp.ge.s32.totalorder %s26, 1
    %s28 = scalar_select %p27, 0, %s26
    %s29 = sadd.s32 1, %s18
    %s30 = scalar_select %p27, %s29, %s18
    %p31 = scmp.ge.s32.totalorder %s30, 1
    %s32 = scalar_select %p31, 0, %s30
    %s33 = sadd.s32 1, %s17
    %s34 = scalar_select %p31, %s33, %s17
    %p35 = scmp.ge.s32.totalorder %s34, 2
    %s36 = scalar_select %p35, 0, %s34
    %s37 = ssub.s32 %s17, %s36
    %s38 = ssub.s32 %s18, %s32
    %s39 = sor.u32 %s37, %s38
    %p40 = scmp.eq.s32.totalorder %s39, 0
    %s42 = sadd.s32 %s41, 1
    %s43 = scalar_select %p40, %s41, %s42
    %p46 = pneg %p40
    %p47 = scmp.eq.s32.totalorder %s10, 1
    %p48 = por %p46, %p47
    %p49 = scmp.ne.s32.totalorder %s41, %s44
    %p50 = scmp.eq.s32.totalorder %s10, 0
    %p51 = por %p49, %p50
    %p52 = scmp.ne.s32.totalorder %s41, %s44
    %p53 = scmp.eq.s32.totalorder %s15, 1
    %p54 = por %p52, %p53
    %p55 = scmp.ne.s32.totalorder %s44, %s45
    %p56 = scmp.eq.s32.totalorder %s15, 0
    %p57 = por %p55, %p56
    %p58 = scmp.ne.s32.totalorder %s44, %s45
    %p59 = scmp.eq.s32.totalorder %s16, 1
    %p60 = por %p58, %p59
    %p62 = scmp.ne.s32.totalorder %s45, %s61
    %p63 = scmp.eq.s32.totalorder %s16, 0
    %p64 = por %p62, %p63
    %s65 = ssub.s32 %s17, %s36
    %s66 = ssub.s32 %s19, %s28
    %s67 = sor.u32 %s65, %s66
    %p68 = scmp.eq.s32.totalorder %s67, 0
    %s70 = sadd.s32 %s69, 1
    %s71 = scalar_select %p68, %s69, %s70
    %p74 = pneg %p68
    %p75 = scmp.eq.s32.totalorder %s10, 1
    %p76 = por %p74, %p75
    %p77 = scmp.ne.s32.totalorder %s69, %s72
    %p78 = scmp.eq.s32.totalorder %s10, 0
    %p79 = por %p77, %p78
    %p80 = scmp.ne.s32.totalorder %s69, %s72
    %p81 = scmp.eq.s32.totalorder %s15, 1
    %p82 = por %p80, %p81
    %p83 = scmp.ne.s32.totalorder %s72, %s73
    %p84 = scmp.eq.s32.totalorder %s15, 0
    %p85 = por %p83, %p84
    %p86 = scmp.ne.s32.totalorder %s72, %s73
    %p87 = scmp.eq.s32.totalorder %s16, 1
    %p88 = por %p86, %p87
    %p90 = scmp.ne.s32.totalorder %s73, %s89
    %p91 = scmp.eq.s32.totalorder %s16, 0
    %p92 = por %p90, %p91
    %s93 = ssub.s32 %s17, %s36
    %s94 = ssub.s32 %s18, %s32
    %s95 = sor.u32 %s93, %s94
    %p96 = scmp.eq.s32.totalorder %s95, 0
    %s98 = sadd.s32 %s97, 1
    %s99 = scalar_select %p96, %s97, %s98
    %p102 = pneg %p96
    %p103 = scmp.eq.s32.totalorder %s10, 1
    %p104 = por %p102, %p103
    %p105 = scmp.ne.s32.totalorder %s97, %s100
    %p106 = scmp.eq.s32.totalorder %s10, 0
    %p107 = por %p105, %p106
    %p108 = scmp.ne.s32.totalorder %s97, %s100
    %p109 = scmp.eq.s32.totalorder %s15, 1
    %p110 = por %p108, %p109
    %p111 = scmp.ne.s32.totalorder %s100, %s101
    %p112 = scmp.eq.s32.totalorder %s15, 0
    %p113 = por %p111, %p112
    %p114 = scmp.ne.s32.totalorder %s100, %s101
    %p115 = scmp.eq.s32.totalorder %s16, 1
    %p116 = por %p114, %p115
    %p118 = scmp.ne.s32.totalorder %s101, %s117
    %p119 = scmp.eq.s32.totalorder %s16, 0
    %p120 = por %p118, %p119
    %s121 = ssub.s32 %s17, %s36
    %p122 = scmp.eq.s32.totalorder %s121, 0
    %s124 = sadd.s32 %s123, 1
    %s125 = scalar_select %p122, %s123, %s124
    %p128 = pneg %p122
    %p129 = scmp.eq.s32.totalorder %s10, 1
    %p130 = por %p128, %p129
    %p131 = scmp.ne.s32.totalorder %s123, %s126
    %p132 = scmp.eq.s32.totalorder %s10, 0
    %p133 = por %p131, %p132
    %p134 = scmp.ne.s32.totalorder %s123, %s126
    %p135 = scmp.eq.s32.totalorder %s15, 1
    %p136 = por %p134, %p135
    %p137 = scmp.ne.s32.totalorder %s126, %s127
    %p138 = scmp.eq.s32.totalorder %s15, 0
    %p139 = por %p137, %p138
    %p140 = scmp.ne.s32.totalorder %s126, %s127
    %p141 = scmp.eq.s32.totalorder %s16, 1
    %p142 = por %p140, %p141
    %p144 = scmp.ne.s32.totalorder %s127, %s143
    %p145 = scmp.eq.s32.totalorder %s16, 0
    %p146 = por %p144, %p145
    %p147 = scmp.le.s32.totalorder 1, %s10
    %p148 = scmp.lt.s32.totalorder %s10, 3
    %p149 = pnand %p147, %p148
    %p150 = pneg %p149
    // Predicated region
    $region9: #{chamfer_distance_l2.1} parent=5 // pred_check
      _
    $region10: #{chamfer_distance_l2.1} parent=5 // pred_check_branch
      %152 = sbr.rel (%p149) target = $region12
    $region11: #{chamfer_distance_l2.1} parent=5 // pred_region
      %s153 = ssub.s32 %s10, 1
    $region12: #{chamfer_distance_l2.1} parent=5 // pred_fallthru
      _
    %p154 = scmp.lt.s32.totalorder %s10, 2
    // Predicated region
    $region13: #{chamfer_distance_l2.1} parent=5 // pred_check
      %p155 = pneg %p154
    $region14: #{chamfer_distance_l2.1} parent=5 // pred_check_branch
      %157 = sbr.rel (%p155) target = $region16
    $region15: #{chamfer_distance_l2.1} parent=5 // pred_region
      // Predicated region
      $region17: #{chamfer_distance_l2.1} parent=15 // pred_check
        %p158 = pneg %p51
      $region18: #{chamfer_distance_l2.1} parent=15 // pred_check_branch
        %160 = sbr.rel (%p158) target = $region20
      $region19: #{chamfer_distance_l2.1} parent=15 // pred_region
        %s161 = smul.u32 32, %s18
        %p162 = scmp.lt.s32.totalorder %s17, 1
        %s163 = scalar_select %p162, %s17, 1
        %p164 = scmp.lt.s32.totalorder %s161, 31
        %s165 = scalar_select %p164, %s161, 31
        %s166 = smul.addr %s163, 32
        %s167 = sadd.s32 %s165, %s166
        %s168 = smul.addr %s167, 8
        %s169 = scalar_lea.vmem %s0, %s168
        %s170 = smul.u32 32, %s18
      $region20: #{chamfer_distance_l2.1} parent=15 // pred_fallthru
        _
      // Predicated region
      $region21: #{chamfer_distance_l2.1} parent=15 // pred_check
        %p171 = pneg %p79
      $region22: #{chamfer_distance_l2.1} parent=15 // pred_check_branch
        %173 = sbr.rel (%p171) target = $region24
      $region23: #{chamfer_distance_l2.1} parent=15 // pred_region
        %s174 = smul.u32 2, %s19
        %p175 = scmp.lt.s32.totalorder %s17, 1
        %s176 = scalar_select %p175, %s17, 1
        %p177 = scmp.lt.s32.totalorder %s174, 1
        %s178 = scalar_select %p177, %s174, 1
        %s179 = smul.addr %s176, 2
        %s180 = sadd.s32 %s178, %s179
        %s181 = smul.addr %s180, 4
        %s182 = scalar_lea.vmem %s1, %s181
        %s183 = smul.u32 2, %s19
      $region24: #{chamfer_distance_l2.1} parent=15 // pred_fallthru
        _
    $region16: #{chamfer_distance_l2.1} parent=5 // pred_fallthru
      _
    %p184 = scmp.le.s32.totalorder 1, %s10
    %p185 = scmp.lt.s32.totalorder %s10, 3
    %p186 = pnand %p184, %p185
    %p187 = pneg %p186
    // Predicated region
    $region25: #{chamfer_distance_l2.1} parent=5 // pred_check
      _
    $region26: #{chamfer_distance_l2.1} parent=5 // pred_check_branch
      %189 = sbr.rel (%p186) target = $region28
    $region27: #{chamfer_distance_l2.1} parent=5 // pred_region
      %s190 = ssub.s32 %s10, 1
      %s191 = smul.u32 32, %s21
      %p192 = scmp.lt.s32.totalorder %s20, 1
      %s193 = scalar_select %p192, %s20, 1
      %p194 = scmp.lt.s32.totalorder %s191, 31
      %s195 = scalar_select %p194, %s191, 31
      %s196 = smul.addr %s193, 32
      %s197 = sadd.s32 %s195, %s196
      %s198 = smul.addr %s197, 8
      %s199 = scalar_lea.vmem %s0, %s198
      %p200 = pneg %p57
      %p201 = pneg %p54
      %s202 = smul.u32 2, %s22
      %p203 = scmp.lt.s32.totalorder %s20, 1
      %s204 = scalar_select %p203, %s20, 1
      %p205 = scmp.lt.s32.totalorder %s202, 1
      %s206 = scalar_select %p205, %s202, 1
      %s207 = smul.addr %s204, 2
      %s208 = sadd.s32 %s206, %s207
      %s209 = smul.addr %s208, 4
      %s210 = scalar_lea.vmem %s1, %s209
      %p211 = pneg %p85
      %p212 = pneg %p82
      %p213 = pneg %p113
      %p214 = pneg %p110
      %s215 = smul.u32 32, %s21
      %p216 = scmp.lt.s32.totalorder %s20, 1
      %s217 = scalar_select %p216, %s20, 1
      %p218 = scmp.lt.s32.totalorder %s215, 31
      %s219 = scalar_select %p218, %s215, 31
      %s220 = smul.addr %s217, 32
      %s221 = sadd.s32 %s219, %s220
      %s222 = smul.addr %s221, 8
      %s223 = scalar_lea.vmem %s2, %s222
      %p224 = pneg %p139
      %p225 = pneg %p136
      %p226 = scmp.lt.s32.totalorder %s20, 1
      %s227 = scalar_select %p226, %s20, 1
      %s228 = smul.addr %s227, 2
      %s229 = scalar_lea.vmem %s3, %s228
      %s230 = smul.u32 32, %s21
      %p231 = scmp.lt.s32.totalorder %s20, 1
      %s232 = scalar_select %p231, %s20, 1
      %p233 = scmp.lt.s32.totalorder %s230, 31
      %s234 = scalar_select %p233, %s230, 31
      %s235 = smul.addr %s232, 32
      %s236 = sadd.s32 %s234, %s235
      %s237 = smul.addr %s236, 8
      %s238 = scalar_lea.vmem %s0, %s237
      %s239 = smul.u32 32, %s21
      %s240 = smul.u32 2, %s22
      %p241 = scmp.lt.s32.totalorder %s20, 1
      %s242 = scalar_select %p241, %s20, 1
      %p243 = scmp.lt.s32.totalorder %s240, 1
      %s244 = scalar_select %p243, %s240, 1
      %s245 = smul.addr %s242, 2
      %s246 = sadd.s32 %s244, %s245
      %s247 = smul.addr %s246, 4
      %s248 = scalar_lea.vmem %s1, %s247
      %s249 = smul.u32 2, %s22
      %s250 = smul.u32 32, %s21
      %p251 = scmp.lt.s32.totalorder %s20, 1
      %s252 = scalar_select %p251, %s20, 1
      %p253 = scmp.lt.s32.totalorder %s250, 31
      %s254 = scalar_select %p253, %s250, 31
      %s255 = smul.addr %s252, 32
      %s256 = sadd.s32 %s254, %s255
      %s257 = smul.addr %s256, 8
      %s258 = scalar_lea.vmem %s2, %s257
      %s259 = smul.u32 32, %s21
      %p260 = scmp.lt.s32.totalorder %s20, 1
      %s261 = scalar_select %p260, %s20, 1
      %s262 = smul.addr %s261, 2
      %s263 = scalar_lea.vmem %s3, %s262
      %v264 = vld [vmem:[%s238] sm:$0xff]
      %v265 = vld [vmem:[%s238 + $0x8] sm:$0xff]
      %v266 = vld [vmem:[%s238 + $0x10] sm:$0xff]
      %v267 = vld [vmem:[%s238 + $0x18] sm:$0xff]
      %v268 = vld [vmem:[%s238 + $0x20] sm:$0xff]
      %v269 = vld [vmem:[%s238 + $0x28] sm:$0xff]
      %v270 = vld [vmem:[%s238 + $0x30] sm:$0xff]
      %v271 = vld [vmem:[%s238 + $0x38] sm:$0xff]
      %v272 = vld [vmem:[%s238 + $0x40] sm:$0xff]
      %v273 = vld [vmem:[%s238 + $0x48] sm:$0xff]
      %v274 = vld [vmem:[%s238 + $0x50] sm:$0xff]
      %v275 = vld [vmem:[%s238 + $0x58] sm:$0xff]
      %v276 = vld [vmem:[%s238 + $0x60] sm:$0xff]
      %v277 = vld [vmem:[%s238 + $0x68] sm:$0xff]
      %v278 = vld [vmem:[%s238 + $0x70] sm:$0xff]
      %v279 = vld [vmem:[%s238 + $0x78] sm:$0xff]
      %v280 = vld [vmem:[%s238 + $0x80] sm:$0xff]
      %v281 = vld [vmem:[%s238 + $0x88] sm:$0xff]
      %v282 = vld [vmem:[%s238 + $0x90] sm:$0xff]
      %v283 = vld [vmem:[%s238 + $0x98] sm:$0xff]
      %v284 = vld [vmem:[%s238 + $0xa0] sm:$0xff]
      %v285 = vld [vmem:[%s238 + $0xa8] sm:$0xff]
      %v286 = vld [vmem:[%s238 + $0xb0] sm:$0xff]
      %v287 = vld [vmem:[%s238 + $0xb8] sm:$0xff]
      %v288 = vld [vmem:[%s238 + $0xc0] sm:$0xff]
      %v289 = vld [vmem:[%s238 + $0xc8] sm:$0xff]
      %v290 = vld [vmem:[%s238 + $0xd0] sm:$0xff]
      %v291 = vld [vmem:[%s238 + $0xd8] sm:$0xff]
      %v292 = vld [vmem:[%s238 + $0xe0] sm:$0xff]
      %v293 = vld [vmem:[%s238 + $0xe8] sm:$0xff]
      %v294 = vld [vmem:[%s238 + $0xf0] sm:$0xff]
      %v295 = vld [vmem:[%s238 + $0xf8] sm:$0xff]
      %v296 = vld [vmem:[%s248] sm:$0x77]
      %298 = vset.pattern.permute.xlu0 0
      %299 = vperm.xlu0 %298, %v264
      %v300 = vpop.permute.xlu0 %299
      %303 = vset.pattern.permute.xlu0 0
      %304 = vperm.xlu0 %303, %v265
      %v305 = vpop.permute.xlu0 %304
      %308 = vset.pattern.permute.xlu0 0
      %309 = vperm.xlu0 %308, %v266
      %v310 = vpop.permute.xlu0 %309
      %313 = vset.pattern.permute.xlu0 0
      %314 = vperm.xlu0 %313, %v267
      %v315 = vpop.permute.xlu0 %314
      %318 = vset.pattern.permute.xlu0 0
      %319 = vperm.xlu0 %318, %v268
      %v320 = vpop.permute.xlu0 %319
      %323 = vset.pattern.permute.xlu0 0
      %324 = vperm.xlu0 %323, %v269
      %v325 = vpop.permute.xlu0 %324
      %328 = vset.pattern.permute.xlu0 0
      %329 = vperm.xlu0 %328, %v270
      %v330 = vpop.permute.xlu0 %329
      %333 = vset.pattern.permute.xlu0 0
      %334 = vperm.xlu0 %333, %v271
      %v335 = vpop.permute.xlu0 %334
      %338 = vset.pattern.permute.xlu0 0
      %339 = vperm.xlu0 %338, %v272
      %v340 = vpop.permute.xlu0 %339
      %343 = vset.pattern.permute.xlu0 0
      %344 = vperm.xlu0 %343, %v273
      %v345 = vpop.permute.xlu0 %344
      %348 = vset.pattern.permute.xlu0 0
      %349 = vperm.xlu0 %348, %v274
      %v350 = vpop.permute.xlu0 %349
      %353 = vset.pattern.permute.xlu0 0
      %354 = vperm.xlu0 %353, %v275
      %v355 = vpop.permute.xlu0 %354
      %358 = vset.pattern.permute.xlu0 0
      %359 = vperm.xlu0 %358, %v276
      %v360 = vpop.permute.xlu0 %359
      %363 = vset.pattern.permute.xlu0 0
      %364 = vperm.xlu0 %363, %v277
      %v365 = vpop.permute.xlu0 %364
      %368 = vset.pattern.permute.xlu0 0
      %369 = vperm.xlu0 %368, %v278
      %v370 = vpop.permute.xlu0 %369
      %373 = vset.pattern.permute.xlu0 0
      %374 = vperm.xlu0 %373, %v279
      %v375 = vpop.permute.xlu0 %374
      %378 = vset.pattern.permute.xlu0 0
      %379 = vperm.xlu0 %378, %v280
      %v380 = vpop.permute.xlu0 %379
      %383 = vset.pattern.permute.xlu0 0
      %384 = vperm.xlu0 %383, %v281
      %v385 = vpop.permute.xlu0 %384
      %388 = vset.pattern.permute.xlu0 0
      %389 = vperm.xlu0 %388, %v282
      %v390 = vpop.permute.xlu0 %389
      %393 = vset.pattern.permute.xlu0 0
      %394 = vperm.xlu0 %393, %v283
      %v395 = vpop.permute.xlu0 %394
      %398 = vset.pattern.permute.xlu0 0
      %399 = vperm.xlu0 %398, %v284
      %v400 = vpop.permute.xlu0 %399
      %403 = vset.pattern.permute.xlu0 0
      %404 = vperm.xlu0 %403, %v285
      %v405 = vpop.permute.xlu0 %404
      %408 = vset.pattern.permute.xlu0 0
      %409 = vperm.xlu0 %408, %v286
      %v410 = vpop.permute.xlu0 %409
      %413 = vset.pattern.permute.xlu0 0
      %414 = vperm.xlu0 %413, %v287
      %v415 = vpop.permute.xlu0 %414
      %418 = vset.pattern.permute.xlu0 0
      %419 = vperm.xlu0 %418, %v288
      %v420 = vpop.permute.xlu0 %419
      %423 = vset.pattern.permute.xlu0 0
      %424 = vperm.xlu0 %423, %v289
      %v425 = vpop.permute.xlu0 %424
      %428 = vset.pattern.permute.xlu0 0
      %429 = vperm.xlu0 %428, %v290
      %v430 = vpop.permute.xlu0 %429
      %433 = vset.pattern.permute.xlu0 0
      %434 = vperm.xlu0 %433, %v291
      %v435 = vpop.permute.xlu0 %434
      %438 = vset.pattern.permute.xlu0 0
      %439 = vperm.xlu0 %438, %v292
      %v440 = vpop.permute.xlu0 %439
      %443 = vset.pattern.permute.xlu0 0
      %444 = vperm.xlu0 %443, %v293
      %v445 = vpop.permute.xlu0 %444
      %448 = vset.pattern.permute.xlu0 0
      %449 = vperm.xlu0 %448, %v294
      %v450 = vpop.permute.xlu0 %449
      %453 = vset.pattern.permute.xlu0 0
      %454 = vperm.xlu0 %453, %v295
      %v455 = vpop.permute.xlu0 %454
      %v458 = vlaneseq
      %v459 = vshrl.u32 %v458, 7
      %v460 = vsub.s32 0, %v459
      %v461 = vrot.slane %v296, %v460
      %v462 = vlaneseq
      %v463 = vshrl.u32 %v462, 7
      %v464 = vsub.s32 4, %v463
      %v465 = vrot.slane %v296, %v464
      %v468 = vlaneseq
      %v469 = vshrl.u32 %v468, 7
      %v470 = vsub.s32 0, %v469
      %v471 = vrot.slane %v461, %v470
      %v472 = vlaneseq
      %v473 = vshrl.u32 %v472, 7
      %v474 = vsub.s32 0, %v473
      %v475 = vrot.slane %v465, %v474
      %v476 = vsub.f32 %v300, %v471
      %v477 = vsub.f32 %v300, %v475
      %v478 = vsub.f32 %v305, %v471
      %v479 = vsub.f32 %v305, %v475
      %v480 = vsub.f32 %v310, %v471
      %v481 = vsub.f32 %v310, %v475
      %v482 = vsub.f32 %v315, %v471
      %v483 = vsub.f32 %v315, %v475
      %v484 = vsub.f32 %v320, %v471
      %v485 = vsub.f32 %v320, %v475
      %v486 = vsub.f32 %v325, %v471
      %v487 = vsub.f32 %v325, %v475
      %v488 = vsub.f32 %v330, %v471
      %v489 = vsub.f32 %v330, %v475
      %v490 = vsub.f32 %v335, %v471
      %v491 = vsub.f32 %v335, %v475
      %v492 = vsub.f32 %v340, %v471
      %v493 = vsub.f32 %v340, %v475
      %v494 = vsub.f32 %v345, %v471
      %v495 = vsub.f32 %v345, %v475
      %v496 = vsub.f32 %v350, %v471
      %v497 = vsub.f32 %v350, %v475
      %v498 = vsub.f32 %v355, %v471
      %v499 = vsub.f32 %v355, %v475
      %v500 = vsub.f32 %v360, %v471
      %v501 = vsub.f32 %v360, %v475
      %v502 = vsub.f32 %v365, %v471
      %v503 = vsub.f32 %v365, %v475
      %v504 = vsub.f32 %v370, %v471
      %v505 = vsub.f32 %v370, %v475
      %v506 = vsub.f32 %v375, %v471
      %v507 = vsub.f32 %v375, %v475
      %v508 = vsub.f32 %v380, %v471
      %v509 = vsub.f32 %v380, %v475
      %v510 = vsub.f32 %v385, %v471
      %v511 = vsub.f32 %v385, %v475
      %v512 = vsub.f32 %v390, %v471
      %v513 = vsub.f32 %v390, %v475
      %v514 = vsub.f32 %v395, %v471
      %v515 = vsub.f32 %v395, %v475
      %v516 = vsub.f32 %v400, %v471
      %v517 = vsub.f32 %v400, %v475
      %v518 = vsub.f32 %v405, %v471
      %v519 = vsub.f32 %v405, %v475
      %v520 = vsub.f32 %v410, %v471
      %v521 = vsub.f32 %v410, %v475
      %v522 = vsub.f32 %v415, %v471
      %v523 = vsub.f32 %v415, %v475
      %v524 = vsub.f32 %v420, %v471
      %v525 = vsub.f32 %v420, %v475
      %v526 = vsub.f32 %v425, %v471
      %v527 = vsub.f32 %v425, %v475
      %v528 = vsub.f32 %v430, %v471
      %v529 = vsub.f32 %v430, %v475
      %v530 = vsub.f32 %v435, %v471
      %v531 = vsub.f32 %v435, %v475
      %v532 = vsub.f32 %v440, %v471
      %v533 = vsub.f32 %v440, %v475
      %v534 = vsub.f32 %v445, %v471
      %v535 = vsub.f32 %v445, %v475
      %v536 = vsub.f32 %v450, %v471
      %v537 = vsub.f32 %v450, %v475
      %v538 = vsub.f32 %v455, %v471
      %v539 = vsub.f32 %v455, %v475
      %540 = vset.pattern.permute.xlu0 1
      %541 = vperm.xlu0 %540, %v264
      %v542 = vpop.permute.xlu0 %541
      %544 = vset.pattern.permute.xlu0 1
      %545 = vperm.xlu0 %544, %v265
      %v546 = vpop.permute.xlu0 %545
      %548 = vset.pattern.permute.xlu0 1
      %549 = vperm.xlu0 %548, %v266
      %v550 = vpop.permute.xlu0 %549
      %552 = vset.pattern.permute.xlu0 1
      %553 = vperm.xlu0 %552, %v267
      %v554 = vpop.permute.xlu0 %553
      %556 = vset.pattern.permute.xlu0 1
      %557 = vperm.xlu0 %556, %v268
      %v558 = vpop.permute.xlu0 %557
      %560 = vset.pattern.permute.xlu0 1
      %561 = vperm.xlu0 %560, %v269
      %v562 = vpop.permute.xlu0 %561
      %564 = vset.pattern.permute.xlu0 1
      %565 = vperm.xlu0 %564, %v270
      %v566 = vpop.permute.xlu0 %565
      %568 = vset.pattern.permute.xlu0 1
      %569 = vperm.xlu0 %568, %v271
      %v570 = vpop.permute.xlu0 %569
      %572 = vset.pattern.permute.xlu0 1
      %573 = vperm.xlu0 %572, %v272
      %v574 = vpop.permute.xlu0 %573
      %576 = vset.pattern.permute.xlu0 1
      %577 = vperm.xlu0 %576, %v273
      %v578 = vpop.permute.xlu0 %577
      %580 = vset.pattern.permute.xlu0 1
      %581 = vperm.xlu0 %580, %v274
      %v582 = vpop.permute.xlu0 %581
      %584 = vset.pattern.permute.xlu0 1
      %585 = vperm.xlu0 %584, %v275
      %v586 = vpop.permute.xlu0 %585
      %588 = vset.pattern.permute.xlu0 1
      %589 = vperm.xlu0 %588, %v276
      %v590 = vpop.permute.xlu0 %589
      %592 = vset.pattern.permute.xlu0 1
      %593 = vperm.xlu0 %592, %v277
      %v594 = vpop.permute.xlu0 %593
      %596 = vset.pattern.permute.xlu0 1
      %597 = vperm.xlu0 %596, %v278
      %v598 = vpop.permute.xlu0 %597
      %600 = vset.pattern.permute.xlu0 1
      %601 = vperm.xlu0 %600, %v279
      %v602 = vpop.permute.xlu0 %601
      %604 = vset.pattern.permute.xlu0 1
      %605 = vperm.xlu0 %604, %v280
      %v606 = vpop.permute.xlu0 %605
      %608 = vset.pattern.permute.xlu0 1
      %609 = vperm.xlu0 %608, %v281
      %v610 = vpop.permute.xlu0 %609
      %612 = vset.pattern.permute.xlu0 1
      %613 = vperm.xlu0 %612, %v282
      %v614 = vpop.permute.xlu0 %613
      %616 = vset.pattern.permute.xlu0 1
      %617 = vperm.xlu0 %616, %v283
      %v618 = vpop.permute.xlu0 %617
      %620 = vset.pattern.permute.xlu0 1
      %621 = vperm.xlu0 %620, %v284
      %v622 = vpop.permute.xlu0 %621
      %624 = vset.pattern.permute.xlu0 1
      %625 = vperm.xlu0 %624, %v285
      %v626 = vpop.permute.xlu0 %625
      %628 = vset.pattern.permute.xlu0 1
      %629 = vperm.xlu0 %628, %v286
      %v630 = vpop.permute.xlu0 %629
      %632 = vset.pattern.permute.xlu0 1
      %633 = vperm.xlu0 %632, %v287
      %v634 = vpop.permute.xlu0 %633
      %636 = vset.pattern.permute.xlu0 1
      %637 = vperm.xlu0 %636, %v288
      %v638 = vpop.permute.xlu0 %637
      %640 = vset.pattern.permute.xlu0 1
      %641 = vperm.xlu0 %640, %v289
      %v642 = vpop.permute.xlu0 %641
      %644 = vset.pattern.permute.xlu0 1
      %645 = vperm.xlu0 %644, %v290
      %v646 = vpop.permute.xlu0 %645
      %648 = vset.pattern.permute.xlu0 1
      %649 = vperm.xlu0 %648, %v291
      %v650 = vpop.permute.xlu0 %649
      %652 = vset.pattern.permute.xlu0 1
      %653 = vperm.xlu0 %652, %v292
      %v654 = vpop.permute.xlu0 %653
      %656 = vset.pattern.permute.xlu0 1
      %657 = vperm.xlu0 %656, %v293
      %v658 = vpop.permute.xlu0 %657
      %660 = vset.pattern.permute.xlu0 1
      %661 = vperm.xlu0 %660, %v294
      %v662 = vpop.permute.xlu0 %661
      %664 = vset.pattern.permute.xlu0 1
      %665 = vperm.xlu0 %664, %v295
      %v666 = vpop.permute.xlu0 %665
      %v668 = vlaneseq
      %v669 = vshrl.u32 %v668, 7
      %v670 = vsub.s32 1, %v669
      %v671 = vrot.slane %v296, %v670
      %v672 = vlaneseq
      %v673 = vshrl.u32 %v672, 7
      %v674 = vsub.s32 5, %v673
      %v675 = vrot.slane %v296, %v674
      %v678 = vlaneseq
      %v679 = vshrl.u32 %v678, 7
      %v680 = vsub.s32 1, %v679
      %v681 = vrot.slane %v671, %v680
      %v682 = vlaneseq
      %v683 = vshrl.u32 %v682, 7
      %v684 = vsub.s32 1, %v683
      %v685 = vrot.slane %v675, %v684
      %v686 = vsub.f32 %v542, %v681
      %v687 = vsub.f32 %v542, %v685
      %v688 = vsub.f32 %v546, %v681
      %v689 = vsub.f32 %v546, %v685
      %v690 = vsub.f32 %v550, %v681
      %v691 = vsub.f32 %v550, %v685
      %v692 = vsub.f32 %v554, %v681
      %v693 = vsub.f32 %v554, %v685
      %v694 = vsub.f32 %v558, %v681
      %v695 = vsub.f32 %v558, %v685
      %v696 = vsub.f32 %v562, %v681
      %v697 = vsub.f32 %v562, %v685
      %v698 = vsub.f32 %v566, %v681
      %v699 = vsub.f32 %v566, %v685
      %v700 = vsub.f32 %v570, %v681
      %v701 = vsub.f32 %v570, %v685
      %v702 = vsub.f32 %v574, %v681
      %v703 = vsub.f32 %v574, %v685
      %v704 = vsub.f32 %v578, %v681
      %v705 = vsub.f32 %v578, %v685
      %v706 = vsub.f32 %v582, %v681
      %v707 = vsub.f32 %v582, %v685
      %v708 = vsub.f32 %v586, %v681
      %v709 = vsub.f32 %v586, %v685
      %v710 = vsub.f32 %v590, %v681
      %v711 = vsub.f32 %v590, %v685
      %v712 = vsub.f32 %v594, %v681
      %v713 = vsub.f32 %v594, %v685
      %v714 = vsub.f32 %v598, %v681
      %v715 = vsub.f32 %v598, %v685
      %v716 = vsub.f32 %v602, %v681
      %v717 = vsub.f32 %v602, %v685
      %v718 = vsub.f32 %v606, %v681
      %v719 = vsub.f32 %v606, %v685
      %v720 = vsub.f32 %v610, %v681
      %v721 = vsub.f32 %v610, %v685
      %v722 = vsub.f32 %v614, %v681
      %v723 = vsub.f32 %v614, %v685
      %v724 = vsub.f32 %v618, %v681
      %v725 = vsub.f32 %v618, %v685
      %v726 = vsub.f32 %v622, %v681
      %v727 = vsub.f32 %v622, %v685
      %v728 = vsub.f32 %v626, %v681
      %v729 = vsub.f32 %v626, %v685
      %v730 = vsub.f32 %v630, %v681
      %v731 = vsub.f32 %v630, %v685
      %v732 = vsub.f32 %v634, %v681
      %v733 = vsub.f32 %v634, %v685
      %v734 = vsub.f32 %v638, %v681
      %v735 = vsub.f32 %v638, %v685
      %v736 = vsub.f32 %v642, %v681
      %v737 = vsub.f32 %v642, %v685
      %v738 = vsub.f32 %v646, %v681
      %v739 = vsub.f32 %v646, %v685
      %v740 = vsub.f32 %v650, %v681
      %v741 = vsub.f32 %v650, %v685
      %v742 = vsub.f32 %v654, %v681
      %v743 = vsub.f32 %v654, %v685
      %v744 = vsub.f32 %v658, %v681
      %v745 = vsub.f32 %v658, %v685
      %v746 = vsub.f32 %v662, %v681
      %v747 = vsub.f32 %v662, %v685
      %v748 = vsub.f32 %v666, %v681
      %v749 = vsub.f32 %v666, %v685
      %750 = vset.pattern.permute.xlu0 2
      %751 = vperm.xlu0 %750, %v264
      %v752 = vpop.permute.xlu0 %751
      %754 = vset.pattern.permute.xlu0 2
      %755 = vperm.xlu0 %754, %v265
      %v756 = vpop.permute.xlu0 %755
      %758 = vset.pattern.permute.xlu0 2
      %759 = vperm.xlu0 %758, %v266
      %v760 = vpop.permute.xlu0 %759
      %762 = vset.pattern.permute.xlu0 2
      %763 = vperm.xlu0 %762, %v267
      %v764 = vpop.permute.xlu0 %763
      %766 = vset.pattern.permute.xlu0 2
      %767 = vperm.xlu0 %766, %v268
      %v768 = vpop.permute.xlu0 %767
      %770 = vset.pattern.permute.xlu0 2
      %771 = vperm.xlu0 %770, %v269
      %v772 = vpop.permute.xlu0 %771
      %774 = vset.pattern.permute.xlu0 2
      %775 = vperm.xlu0 %774, %v270
      %v776 = vpop.permute.xlu0 %775
      %778 = vset.pattern.permute.xlu0 2
      %779 = vperm.xlu0 %778, %v271
      %v780 = vpop.permute.xlu0 %779
      %782 = vset.pattern.permute.xlu0 2
      %783 = vperm.xlu0 %782, %v272
      %v784 = vpop.permute.xlu0 %783
      %786 = vset.pattern.permute.xlu0 2
      %787 = vperm.xlu0 %786, %v273
      %v788 = vpop.permute.xlu0 %787
      %790 = vset.pattern.permute.xlu0 2
      %791 = vperm.xlu0 %790, %v274
      %v792 = vpop.permute.xlu0 %791
      %794 = vset.pattern.permute.xlu0 2
      %795 = vperm.xlu0 %794, %v275
      %v796 = vpop.permute.xlu0 %795
      %798 = vset.pattern.permute.xlu0 2
      %799 = vperm.xlu0 %798, %v276
      %v800 = vpop.permute.xlu0 %799
      %802 = vset.pattern.permute.xlu0 2
      %803 = vperm.xlu0 %802, %v277
      %v804 = vpop.permute.xlu0 %803
      %806 = vset.pattern.permute.xlu0 2
      %807 = vperm.xlu0 %806, %v278
      %v808 = vpop.permute.xlu0 %807
      %810 = vset.pattern.permute.xlu0 2
      %811 = vperm.xlu0 %810, %v279
      %v812 = vpop.permute.xlu0 %811
      %814 = vset.pattern.permute.xlu0 2
      %815 = vperm.xlu0 %814, %v280
      %v816 = vpop.permute.xlu0 %815
      %818 = vset.pattern.permute.xlu0 2
      %819 = vperm.xlu0 %818, %v281
      %v820 = vpop.permute.xlu0 %819
      %822 = vset.pattern.permute.xlu0 2
      %823 = vperm.xlu0 %822, %v282
      %v824 = vpop.permute.xlu0 %823
      %826 = vset.pattern.permute.xlu0 2
      %827 = vperm.xlu0 %826, %v283
      %v828 = vpop.permute.xlu0 %827
      %830 = vset.pattern.permute.xlu0 2
      %831 = vperm.xlu0 %830, %v284
      %v832 = vpop.permute.xlu0 %831
      %834 = vset.pattern.permute.xlu0 2
      %835 = vperm.xlu0 %834, %v285
      %v836 = vpop.permute.xlu0 %835
      %838 = vset.pattern.permute.xlu0 2
      %839 = vperm.xlu0 %838, %v286
      %v840 = vpop.permute.xlu0 %839
      %842 = vset.pattern.permute.xlu0 2
      %843 = vperm.xlu0 %842, %v287
      %v844 = vpop.permute.xlu0 %843
      %846 = vset.pattern.permute.xlu0 2
      %847 = vperm.xlu0 %846, %v288
      %v848 = vpop.permute.xlu0 %847
      %850 = vset.pattern.permute.xlu0 2
      %851 = vperm.xlu0 %850, %v289
      %v852 = vpop.permute.xlu0 %851
      %854 = vset.pattern.permute.xlu0 2
      %855 = vperm.xlu0 %854, %v290
      %v856 = vpop.permute.xlu0 %855
      %858 = vset.pattern.permute.xlu0 2
      %859 = vperm.xlu0 %858, %v291
      %v860 = vpop.permute.xlu0 %859
      %862 = vset.pattern.permute.xlu0 2
      %863 = vperm.xlu0 %862, %v292
      %v864 = vpop.permute.xlu0 %863
      %866 = vset.pattern.permute.xlu0 2
      %867 = vperm.xlu0 %866, %v293
      %v868 = vpop.permute.xlu0 %867
      %870 = vset.pattern.permute.xlu0 2
      %871 = vperm.xlu0 %870, %v294
      %v872 = vpop.permute.xlu0 %871
      %874 = vset.pattern.permute.xlu0 2
      %875 = vperm.xlu0 %874, %v295
      %v876 = vpop.permute.xlu0 %875
      %v878 = vlaneseq
      %v879 = vshrl.u32 %v878, 7
      %v880 = vsub.s32 2, %v879
      %v881 = vrot.slane %v296, %v880
      %v882 = vlaneseq
      %v883 = vshrl.u32 %v882, 7
      %v884 = vsub.s32 6, %v883
      %v885 = vrot.slane %v296, %v884
      %v888 = vlaneseq
      %v889 = vshrl.u32 %v888, 7
      %v890 = vsub.s32 2, %v889
      %v891 = vrot.slane %v881, %v890
      %v892 = vlaneseq
      %v893 = vshrl.u32 %v892, 7
      %v894 = vsub.s32 2, %v893
      %v895 = vrot.slane %v885, %v894
      %v896 = vsub.f32 %v752, %v891
      %v897 = vsub.f32 %v752, %v895
      %v898 = vsub.f32 %v756, %v891
      %v899 = vsub.f32 %v756, %v895
      %v900 = vsub.f32 %v760, %v891
      %v901 = vsub.f32 %v760, %v895
      %v902 = vsub.f32 %v764, %v891
      %v903 = vsub.f32 %v764, %v895
      %v904 = vsub.f32 %v768, %v891
      %v905 = vsub.f32 %v768, %v895
      %v906 = vsub.f32 %v772, %v891
      %v907 = vsub.f32 %v772, %v895
      %v908 = vsub.f32 %v776, %v891
      %v909 = vsub.f32 %v776, %v895
      %v910 = vsub.f32 %v780, %v891
      %v911 = vsub.f32 %v780, %v895
      %v912 = vsub.f32 %v784, %v891
      %v913 = vsub.f32 %v784, %v895
      %v914 = vsub.f32 %v788, %v891
      %v915 = vsub.f32 %v788, %v895
      %v916 = vsub.f32 %v792, %v891
      %v917 = vsub.f32 %v792, %v895
      %v918 = vsub.f32 %v796, %v891
      %v919 = vsub.f32 %v796, %v895
      %v920 = vsub.f32 %v800, %v891
      %v921 = vsub.f32 %v800, %v895
      %v922 = vsub.f32 %v804, %v891
      %v923 = vsub.f32 %v804, %v895
      %v924 = vsub.f32 %v808, %v891
      %v925 = vsub.f32 %v808, %v895
      %v926 = vsub.f32 %v812, %v891
      %v927 = vsub.f32 %v812, %v895
      %v928 = vsub.f32 %v816, %v891
      %v929 = vsub.f32 %v816, %v895
      %v930 = vsub.f32 %v820, %v891
      %v931 = vsub.f32 %v820, %v895
      %v932 = vsub.f32 %v824, %v891
      %v933 = vsub.f32 %v824, %v895
      %v934 = vsub.f32 %v828, %v891
      %v935 = vsub.f32 %v828, %v895
      %v936 = vsub.f32 %v832, %v891
      %v937 = vsub.f32 %v832, %v895
      %v938 = vsub.f32 %v836, %v891
      %v939 = vsub.f32 %v836, %v895
      %v940 = vsub.f32 %v840, %v891
      %v941 = vsub.f32 %v840, %v895
      %v942 = vsub.f32 %v844, %v891
      %v943 = vsub.f32 %v844, %v895
      %v944 = vsub.f32 %v848, %v891
      %v945 = vsub.f32 %v848, %v895
      %v946 = vsub.f32 %v852, %v891
      %v947 = vsub.f32 %v852, %v895
      %v948 = vsub.f32 %v856, %v891
      %v949 = vsub.f32 %v856, %v895
      %v950 = vsub.f32 %v860, %v891
      %v951 = vsub.f32 %v860, %v895
      %v952 = vsub.f32 %v864, %v891
      %v953 = vsub.f32 %v864, %v895
      %v954 = vsub.f32 %v868, %v891
      %v955 = vsub.f32 %v868, %v895
      %v956 = vsub.f32 %v872, %v891
      %v957 = vsub.f32 %v872, %v895
      %v958 = vsub.f32 %v876, %v891
      %v959 = vsub.f32 %v876, %v895
      %v960 = vmul.f32 %v476, %v476
      %v961 = vmul.f32 %v477, %v477
      %v962 = vmul.f32 %v478, %v478
      %v963 = vmul.f32 %v479, %v479
      %v964 = vmul.f32 %v480, %v480
      %v965 = vmul.f32 %v481, %v481
      %v966 = vmul.f32 %v482, %v482
      %v967 = vmul.f32 %v483, %v483
      %v968 = vmul.f32 %v484, %v484
      %v969 = vmul.f32 %v485, %v485
      %v970 = vmul.f32 %v486, %v486
      %v971 = vmul.f32 %v487, %v487
      %v972 = vmul.f32 %v488, %v488
      %v973 = vmul.f32 %v489, %v489
      %v974 = vmul.f32 %v490, %v490
      %v975 = vmul.f32 %v491, %v491
      %v976 = vmul.f32 %v492, %v492
      %v977 = vmul.f32 %v493, %v493
      %v978 = vmul.f32 %v494, %v494
      %v979 = vmul.f32 %v495, %v495
      %v980 = vmul.f32 %v496, %v496
      %v981 = vmul.f32 %v497, %v497
      %v982 = vmul.f32 %v498, %v498
      %v983 = vmul.f32 %v499, %v499
      %v984 = vmul.f32 %v500, %v500
      %v985 = vmul.f32 %v501, %v501
      %v986 = vmul.f32 %v502, %v502
      %v987 = vmul.f32 %v503, %v503
      %v988 = vmul.f32 %v504, %v504
      %v989 = vmul.f32 %v505, %v505
      %v990 = vmul.f32 %v506, %v506
      %v991 = vmul.f32 %v507, %v507
      %v992 = vmul.f32 %v508, %v508
      %v993 = vmul.f32 %v509, %v509
      %v994 = vmul.f32 %v510, %v510
      %v995 = vmul.f32 %v511, %v511
      %v996 = vmul.f32 %v512, %v512
      %v997 = vmul.f32 %v513, %v513
      %v998 = vmul.f32 %v514, %v514
      %v999 = vmul.f32 %v515, %v515
      %v1000 = vmul.f32 %v516, %v516
      %v1001 = vmul.f32 %v517, %v517
      %v1002 = vmul.f32 %v518, %v518
      %v1003 = vmul.f32 %v519, %v519
      %v1004 = vmul.f32 %v520, %v520
      %v1005 = vmul.f32 %v521, %v521
      %v1006 = vmul.f32 %v522, %v522
      %v1007 = vmul.f32 %v523, %v523
      %v1008 = vmul.f32 %v524, %v524
      %v1009 = vmul.f32 %v525, %v525
      %v1010 = vmul.f32 %v526, %v526
      %v1011 = vmul.f32 %v527, %v527
      %v1012 = vmul.f32 %v528, %v528
      %v1013 = vmul.f32 %v529, %v529
      %v1014 = vmul.f32 %v530, %v530
      %v1015 = vmul.f32 %v531, %v531
      %v1016 = vmul.f32 %v532, %v532
      %v1017 = vmul.f32 %v533, %v533
      %v1018 = vmul.f32 %v534, %v534
      %v1019 = vmul.f32 %v535, %v535
      %v1020 = vmul.f32 %v536, %v536
      %v1021 = vmul.f32 %v537, %v537
      %v1022 = vmul.f32 %v538, %v538
      %v1023 = vmul.f32 %v539, %v539
      %v1024 = vmul.f32 %v686, %v686
      %v1025 = vmul.f32 %v687, %v687
      %v1026 = vmul.f32 %v688, %v688
      %v1027 = vmul.f32 %v689, %v689
      %v1028 = vmul.f32 %v690, %v690
      %v1029 = vmul.f32 %v691, %v691
      %v1030 = vmul.f32 %v692, %v692
      %v1031 = vmul.f32 %v693, %v693
      %v1032 = vmul.f32 %v694, %v694
      %v1033 = vmul.f32 %v695, %v695
      %v1034 = vmul.f32 %v696, %v696
      %v1035 = vmul.f32 %v697, %v697
      %v1036 = vmul.f32 %v698, %v698
      %v1037 = vmul.f32 %v699, %v699
      %v1038 = vmul.f32 %v700, %v700
      %v1039 = vmul.f32 %v701, %v701
      %v1040 = vmul.f32 %v702, %v702
      %v1041 = vmul.f32 %v703, %v703
      %v1042 = vmul.f32 %v704, %v704
      %v1043 = vmul.f32 %v705, %v705
      %v1044 = vmul.f32 %v706, %v706
      %v1045 = vmul.f32 %v707, %v707
      %v1046 = vmul.f32 %v708, %v708
      %v1047 = vmul.f32 %v709, %v709
      %v1048 = vmul.f32 %v710, %v710
      %v1049 = vmul.f32 %v711, %v711
      %v1050 = vmul.f32 %v712, %v712
      %v1051 = vmul.f32 %v713, %v713
      %v1052 = vmul.f32 %v714, %v714
      %v1053 = vmul.f32 %v715, %v715
      %v1054 = vmul.f32 %v716, %v716
      %v1055 = vmul.f32 %v717, %v717
      %v1056 = vmul.f32 %v718, %v718
      %v1057 = vmul.f32 %v719, %v719
      %v1058 = vmul.f32 %v720, %v720
      %v1059 = vmul.f32 %v721, %v721
      %v1060 = vmul.f32 %v722, %v722
      %v1061 = vmul.f32 %v723, %v723
      %v1062 = vmul.f32 %v724, %v724
      %v1063 = vmul.f32 %v725, %v725
      %v1064 = vmul.f32 %v726, %v726
      %v1065 = vmul.f32 %v727, %v727
      %v1066 = vmul.f32 %v728, %v728
      %v1067 = vmul.f32 %v729, %v729
      %v1068 = vmul.f32 %v730, %v730
      %v1069 = vmul.f32 %v731, %v731
      %v1070 = vmul.f32 %v732, %v732
      %v1071 = vmul.f32 %v733, %v733
      %v1072 = vmul.f32 %v734, %v734
      %v1073 = vmul.f32 %v735, %v735
      %v1074 = vmul.f32 %v736, %v736
      %v1075 = vmul.f32 %v737, %v737
      %v1076 = vmul.f32 %v738, %v738
      %v1077 = vmul.f32 %v739, %v739
      %v1078 = vmul.f32 %v740, %v740
      %v1079 = vmul.f32 %v741, %v741
      %v1080 = vmul.f32 %v742, %v742
      %v1081 = vmul.f32 %v743, %v743
      %v1082 = vmul.f32 %v744, %v744
      %v1083 = vmul.f32 %v745, %v745
      %v1084 = vmul.f32 %v746, %v746
      %v1085 = vmul.f32 %v747, %v747
      %v1086 = vmul.f32 %v748, %v748
      %v1087 = vmul.f32 %v749, %v749
      %v1088 = vadd.f32 %v960, %v1024
      %v1089 = vadd.f32 %v961, %v1025
      %v1090 = vadd.f32 %v962, %v1026
      %v1091 = vadd.f32 %v963, %v1027
      %v1092 = vadd.f32 %v964, %v1028
      %v1093 = vadd.f32 %v965, %v1029
      %v1094 = vadd.f32 %v966, %v1030
      %v1095 = vadd.f32 %v967, %v1031
      %v1096 = vadd.f32 %v968, %v1032
      %v1097 = vadd.f32 %v969, %v1033
      %v1098 = vadd.f32 %v970, %v1034
      %v1099 = vadd.f32 %v971, %v1035
      %v1100 = vadd.f32 %v972, %v1036
      %v1101 = vadd.f32 %v973, %v1037
      %v1102 = vadd.f32 %v974, %v1038
      %v1103 = vadd.f32 %v975, %v1039
      %v1104 = vadd.f32 %v976, %v1040
      %v1105 = vadd.f32 %v977, %v1041
      %v1106 = vadd.f32 %v978, %v1042
      %v1107 = vadd.f32 %v979, %v1043
      %v1108 = vadd.f32 %v980, %v1044
      %v1109 = vadd.f32 %v981, %v1045
      %v1110 = vadd.f32 %v982, %v1046
      %v1111 = vadd.f32 %v983, %v1047
      %v1112 = vadd.f32 %v984, %v1048
      %v1113 = vadd.f32 %v985, %v1049
      %v1114 = vadd.f32 %v986, %v1050
      %v1115 = vadd.f32 %v987, %v1051
      %v1116 = vadd.f32 %v988, %v1052
      %v1117 = vadd.f32 %v989, %v1053
      %v1118 = vadd.f32 %v990, %v1054
      %v1119 = vadd.f32 %v991, %v1055
      %v1120 = vadd.f32 %v992, %v1056
      %v1121 = vadd.f32 %v993, %v1057
      %v1122 = vadd.f32 %v994, %v1058
      %v1123 = vadd.f32 %v995, %v1059
      %v1124 = vadd.f32 %v996, %v1060
      %v1125 = vadd.f32 %v997, %v1061
      %v1126 = vadd.f32 %v998, %v1062
      %v1127 = vadd.f32 %v999, %v1063
      %v1128 = vadd.f32 %v1000, %v1064
      %v1129 = vadd.f32 %v1001, %v1065
      %v1130 = vadd.f32 %v1002, %v1066
      %v1131 = vadd.f32 %v1003, %v1067
      %v1132 = vadd.f32 %v1004, %v1068
      %v1133 = vadd.f32 %v1005, %v1069
      %v1134 = vadd.f32 %v1006, %v1070
      %v1135 = vadd.f32 %v1007, %v1071
      %v1136 = vadd.f32 %v1008, %v1072
      %v1137 = vadd.f32 %v1009, %v1073
      %v1138 = vadd.f32 %v1010, %v1074
      %v1139 = vadd.f32 %v1011, %v1075
      %v1140 = vadd.f32 %v1012, %v1076
      %v1141 = vadd.f32 %v1013, %v1077
      %v1142 = vadd.f32 %v1014, %v1078
      %v1143 = vadd.f32 %v1015, %v1079
      %v1144 = vadd.f32 %v1016, %v1080
      %v1145 = vadd.f32 %v1017, %v1081
      %v1146 = vadd.f32 %v1018, %v1082
      %v1147 = vadd.f32 %v1019, %v1083
      %v1148 = vadd.f32 %v1020, %v1084
      %v1149 = vadd.f32 %v1021, %v1085
      %v1150 = vadd.f32 %v1022, %v1086
      %v1151 = vadd.f32 %v1023, %v1087
      %v1152 = vmul.f32 %v896, %v896
      %v1153 = vmul.f32 %v897, %v897
      %v1154 = vmul.f32 %v898, %v898
      %v1155 = vmul.f32 %v899, %v899
      %v1156 = vmul.f32 %v900, %v900
      %v1157 = vmul.f32 %v901, %v901
      %v1158 = vmul.f32 %v902, %v902
      %v1159 = vmul.f32 %v903, %v903
      %v1160 = vmul.f32 %v904, %v904
      %v1161 = vmul.f32 %v905, %v905
      %v1162 = vmul.f32 %v906, %v906
      %v1163 = vmul.f32 %v907, %v907
      %v1164 = vmul.f32 %v908, %v908
      %v1165 = vmul.f32 %v909, %v909
      %v1166 = vmul.f32 %v910, %v910
      %v1167 = vmul.f32 %v911, %v911
      %v1168 = vmul.f32 %v912, %v912
      %v1169 = vmul.f32 %v913, %v913
      %v1170 = vmul.f32 %v914, %v914
      %v1171 = vmul.f32 %v915, %v915
      %v1172 = vmul.f32 %v916, %v916
      %v1173 = vmul.f32 %v917, %v917
      %v1174 = vmul.f32 %v918, %v918
      %v1175 = vmul.f32 %v919, %v919
      %v1176 = vmul.f32 %v920, %v920
      %v1177 = vmul.f32 %v921, %v921
      %v1178 = vmul.f32 %v922, %v922
      %v1179 = vmul.f32 %v923, %v923
      %v1180 = vmul.f32 %v924, %v924
      %v1181 = vmul.f32 %v925, %v925
      %v1182 = vmul.f32 %v926, %v926
      %v1183 = vmul.f32 %v927, %v927
      %v1184 = vmul.f32 %v928, %v928
      %v1185 = vmul.f32 %v929, %v929
      %v1186 = vmul.f32 %v930, %v930
      %v1187 = vmul.f32 %v931, %v931
      %v1188 = vmul.f32 %v932, %v932
      %v1189 = vmul.f32 %v933, %v933
      %v1190 = vmul.f32 %v934, %v934
      %v1191 = vmul.f32 %v935, %v935
      %v1192 = vmul.f32 %v936, %v936
      %v1193 = vmul.f32 %v937, %v937
      %v1194 = vmul.f32 %v938, %v938
      %v1195 = vmul.f32 %v939, %v939
      %v1196 = vmul.f32 %v940, %v940
      %v1197 = vmul.f32 %v941, %v941
      %v1198 = vmul.f32 %v942, %v942
      %v1199 = vmul.f32 %v943, %v943
      %v1200 = vmul.f32 %v944, %v944
      %v1201 = vmul.f32 %v945, %v945
      %v1202 = vmul.f32 %v946, %v946
      %v1203 = vmul.f32 %v947, %v947
      %v1204 = vmul.f32 %v948, %v948
      %v1205 = vmul.f32 %v949, %v949
      %v1206 = vmul.f32 %v950, %v950
      %v1207 = vmul.f32 %v951, %v951
      %v1208 = vmul.f32 %v952, %v952
      %v1209 = vmul.f32 %v953, %v953
      %v1210 = vmul.f32 %v954, %v954
      %v1211 = vmul.f32 %v955, %v955
      %v1212 = vmul.f32 %v956, %v956
      %v1213 = vmul.f32 %v957, %v957
      %v1214 = vmul.f32 %v958, %v958
      %v1215 = vmul.f32 %v959, %v959
      %v1216 = vadd.f32 %v1088, %v1152
      %v1217 = vadd.f32 %v1089, %v1153
      %v1218 = vadd.f32 %v1090, %v1154
      %v1219 = vadd.f32 %v1091, %v1155
      %v1220 = vadd.f32 %v1092, %v1156
      %v1221 = vadd.f32 %v1093, %v1157
      %v1222 = vadd.f32 %v1094, %v1158
      %v1223 = vadd.f32 %v1095, %v1159
      %v1224 = vadd.f32 %v1096, %v1160
      %v1225 = vadd.f32 %v1097, %v1161
      %v1226 = vadd.f32 %v1098, %v1162
      %v1227 = vadd.f32 %v1099, %v1163
      %v1228 = vadd.f32 %v1100, %v1164
      %v1229 = vadd.f32 %v1101, %v1165
      %v1230 = vadd.f32 %v1102, %v1166
      %v1231 = vadd.f32 %v1103, %v1167
      %v1232 = vadd.f32 %v1104, %v1168
      %v1233 = vadd.f32 %v1105, %v1169
      %v1234 = vadd.f32 %v1106, %v1170
      %v1235 = vadd.f32 %v1107, %v1171
      %v1236 = vadd.f32 %v1108, %v1172
      %v1237 = vadd.f32 %v1109, %v1173
      %v1238 = vadd.f32 %v1110, %v1174
      %v1239 = vadd.f32 %v1111, %v1175
      %v1240 = vadd.f32 %v1112, %v1176
      %v1241 = vadd.f32 %v1113, %v1177
      %v1242 = vadd.f32 %v1114, %v1178
      %v1243 = vadd.f32 %v1115, %v1179
      %v1244 = vadd.f32 %v1116, %v1180
      %v1245 = vadd.f32 %v1117, %v1181
      %v1246 = vadd.f32 %v1118, %v1182
      %v1247 = vadd.f32 %v1119, %v1183
      %v1248 = vadd.f32 %v1120, %v1184
      %v1249 = vadd.f32 %v1121, %v1185
      %v1250 = vadd.f32 %v1122, %v1186
      %v1251 = vadd.f32 %v1123, %v1187
      %v1252 = vadd.f32 %v1124, %v1188
      %v1253 = vadd.f32 %v1125, %v1189
      %v1254 = vadd.f32 %v1126, %v1190
      %v1255 = vadd.f32 %v1127, %v1191
      %v1256 = vadd.f32 %v1128, %v1192
      %v1257 = vadd.f32 %v1129, %v1193
      %v1258 = vadd.f32 %v1130, %v1194
      %v1259 = vadd.f32 %v1131, %v1195
      %v1260 = vadd.f32 %v1132, %v1196
      %v1261 = vadd.f32 %v1133, %v1197
      %v1262 = vadd.f32 %v1134, %v1198
      %v1263 = vadd.f32 %v1135, %v1199
      %v1264 = vadd.f32 %v1136, %v1200
      %v1265 = vadd.f32 %v1137, %v1201
      %v1266 = vadd.f32 %v1138, %v1202
      %v1267 = vadd.f32 %v1139, %v1203
      %v1268 = vadd.f32 %v1140, %v1204
      %v1269 = vadd.f32 %v1141, %v1205
      %v1270 = vadd.f32 %v1142, %v1206
      %v1271 = vadd.f32 %v1143, %v1207
      %v1272 = vadd.f32 %v1144, %v1208
      %v1273 = vadd.f32 %v1145, %v1209
      %v1274 = vadd.f32 %v1146, %v1210
      %v1275 = vadd.f32 %v1147, %v1211
      %v1276 = vadd.f32 %v1148, %v1212
      %v1277 = vadd.f32 %v1149, %v1213
      %v1278 = vadd.f32 %v1150, %v1214
      %v1279 = vadd.f32 %v1151, %v1215
      %v1280 = vmin.f32 %v1216, %v1217
      %1281 = vmin.xlane.f32.xlu0 %v1280
      %v1282 = vpop.xlane.xlu0 %1281
      %v1283 = vmin.f32 %v1218, %v1219
      %1284 = vmin.xlane.f32.xlu0 %v1283
      %v1285 = vpop.xlane.xlu0 %1284
      %v1286 = vmin.f32 %v1220, %v1221
      %1287 = vmin.xlane.f32.xlu0 %v1286
      %v1288 = vpop.xlane.xlu0 %1287
      %v1289 = vmin.f32 %v1222, %v1223
      %1290 = vmin.xlane.f32.xlu0 %v1289
      %v1291 = vpop.xlane.xlu0 %1290
      %v1292 = vmin.f32 %v1224, %v1225
      %1293 = vmin.xlane.f32.xlu0 %v1292
      %v1294 = vpop.xlane.xlu0 %1293
      %v1295 = vmin.f32 %v1226, %v1227
      %1296 = vmin.xlane.f32.xlu0 %v1295
      %v1297 = vpop.xlane.xlu0 %1296
      %v1298 = vmin.f32 %v1228, %v1229
      %1299 = vmin.xlane.f32.xlu0 %v1298
      %v1300 = vpop.xlane.xlu0 %1299
      %v1301 = vmin.f32 %v1230, %v1231
      %1302 = vmin.xlane.f32.xlu0 %v1301
      %v1303 = vpop.xlane.xlu0 %1302
      %v1304 = vmin.f32 %v1232, %v1233
      %1305 = vmin.xlane.f32.xlu0 %v1304
      %v1306 = vpop.xlane.xlu0 %1305
      %v1307 = vmin.f32 %v1234, %v1235
      %1308 = vmin.xlane.f32.xlu0 %v1307
      %v1309 = vpop.xlane.xlu0 %1308
      %v1310 = vmin.f32 %v1236, %v1237
      %1311 = vmin.xlane.f32.xlu0 %v1310
      %v1312 = vpop.xlane.xlu0 %1311
      %v1313 = vmin.f32 %v1238, %v1239
      %1314 = vmin.xlane.f32.xlu0 %v1313
      %v1315 = vpop.xlane.xlu0 %1314
      %v1316 = vmin.f32 %v1240, %v1241
      %1317 = vmin.xlane.f32.xlu0 %v1316
      %v1318 = vpop.xlane.xlu0 %1317
      %v1319 = vmin.f32 %v1242, %v1243
      %1320 = vmin.xlane.f32.xlu0 %v1319
      %v1321 = vpop.xlane.xlu0 %1320
      %v1322 = vmin.f32 %v1244, %v1245
      %1323 = vmin.xlane.f32.xlu0 %v1322
      %v1324 = vpop.xlane.xlu0 %1323
      %v1325 = vmin.f32 %v1246, %v1247
      %1326 = vmin.xlane.f32.xlu0 %v1325
      %v1327 = vpop.xlane.xlu0 %1326
      %v1328 = vmin.f32 %v1248, %v1249
      %1329 = vmin.xlane.f32.xlu0 %v1328
      %v1330 = vpop.xlane.xlu0 %1329
      %v1331 = vmin.f32 %v1250, %v1251
      %1332 = vmin.xlane.f32.xlu0 %v1331
      %v1333 = vpop.xlane.xlu0 %1332
      %v1334 = vmin.f32 %v1252, %v1253
      %1335 = vmin.xlane.f32.xlu0 %v1334
      %v1336 = vpop.xlane.xlu0 %1335
      %v1337 = vmin.f32 %v1254, %v1255
      %1338 = vmin.xlane.f32.xlu0 %v1337
      %v1339 = vpop.xlane.xlu0 %1338
      %v1340 = vmin.f32 %v1256, %v1257
      %1341 = vmin.xlane.f32.xlu0 %v1340
      %v1342 = vpop.xlane.xlu0 %1341
      %v1343 = vmin.f32 %v1258, %v1259
      %1344 = vmin.xlane.f32.xlu0 %v1343
      %v1345 = vpop.xlane.xlu0 %1344
      %v1346 = vmin.f32 %v1260, %v1261
      %1347 = vmin.xlane.f32.xlu0 %v1346
      %v1348 = vpop.xlane.xlu0 %1347
      %v1349 = vmin.f32 %v1262, %v1263
      %1350 = vmin.xlane.f32.xlu0 %v1349
      %v1351 = vpop.xlane.xlu0 %1350
      %v1352 = vmin.f32 %v1264, %v1265
      %1353 = vmin.xlane.f32.xlu0 %v1352
      %v1354 = vpop.xlane.xlu0 %1353
      %v1355 = vmin.f32 %v1266, %v1267
      %1356 = vmin.xlane.f32.xlu0 %v1355
      %v1357 = vpop.xlane.xlu0 %1356
      %v1358 = vmin.f32 %v1268, %v1269
      %1359 = vmin.xlane.f32.xlu0 %v1358
      %v1360 = vpop.xlane.xlu0 %1359
      %v1361 = vmin.f32 %v1270, %v1271
      %1362 = vmin.xlane.f32.xlu0 %v1361
      %v1363 = vpop.xlane.xlu0 %1362
      %v1364 = vmin.f32 %v1272, %v1273
      %1365 = vmin.xlane.f32.xlu0 %v1364
      %v1366 = vpop.xlane.xlu0 %1365
      %v1367 = vmin.f32 %v1274, %v1275
      %1368 = vmin.xlane.f32.xlu0 %v1367
      %v1369 = vpop.xlane.xlu0 %1368
      %v1370 = vmin.f32 %v1276, %v1277
      %1371 = vmin.xlane.f32.xlu0 %v1370
      %v1372 = vpop.xlane.xlu0 %1371
      %v1373 = vmin.f32 %v1278, %v1279
      %1374 = vmin.xlane.f32.xlu0 %v1373
      %v1375 = vpop.xlane.xlu0 %1374
      %v1376 = vmin.f32 %v1216, %v1220
      %v1377 = vmin.f32 %v1218, %v1222
      %v1378 = vmin.f32 %v1376, %v1224
      %v1379 = vmin.f32 %v1377, %v1226
      %v1380 = vmin.f32 %v1378, %v1228
      %v1381 = vmin.f32 %v1379, %v1230
      %v1382 = vmin.f32 %v1380, %v1232
      %v1383 = vmin.f32 %v1381, %v1234
      %v1384 = vmin.f32 %v1382, %v1236
      %v1385 = vmin.f32 %v1383, %v1238
      %v1386 = vmin.f32 %v1384, %v1240
      %v1387 = vmin.f32 %v1385, %v1242
      %v1388 = vmin.f32 %v1386, %v1244
      %v1389 = vmin.f32 %v1387, %v1246
      %v1390 = vmin.f32 %v1388, %v1248
      %v1391 = vmin.f32 %v1389, %v1250
      %v1392 = vmin.f32 %v1390, %v1252
      %v1393 = vmin.f32 %v1391, %v1254
      %v1394 = vmin.f32 %v1392, %v1256
      %v1395 = vmin.f32 %v1393, %v1258
      %v1396 = vmin.f32 %v1394, %v1260
      %v1397 = vmin.f32 %v1395, %v1262
      %v1398 = vmin.f32 %v1396, %v1264
      %v1399 = vmin.f32 %v1397, %v1266
      %v1400 = vmin.f32 %v1398, %v1268
      %v1401 = vmin.f32 %v1399, %v1270
      %v1402 = vmin.f32 %v1400, %v1272
      %v1403 = vmin.f32 %v1401, %v1274
      %v1404 = vmin.f32 %v1402, %v1276
      %v1405 = vmin.f32 %v1403, %v1278
      %v1406 = vmin.f32 %v1404, %v1405
      %v1407 = vrot.slane %v1406, 4
      %v1408 = vmin.f32 %v1406, %v1407
      %v1409 = vrot.slane %v1408, 2
      %v1410 = vmin.f32 %v1408, %v1409
      %v1411 = vrot.slane %v1410, 1
      %v1412 = vmin.f32 %v1410, %v1411
      %v1413 = vmin.f32 %v1217, %v1221
      %v1414 = vmin.f32 %v1219, %v1223
      %v1415 = vmin.f32 %v1413, %v1225
      %v1416 = vmin.f32 %v1414, %v1227
      %v1417 = vmin.f32 %v1415, %v1229
      %v1418 = vmin.f32 %v1416, %v1231
      %v1419 = vmin.f32 %v1417, %v1233
      %v1420 = vmin.f32 %v1418, %v1235
      %v1421 = vmin.f32 %v1419, %v1237
      %v1422 = vmin.f32 %v1420, %v1239
      %v1423 = vmin.f32 %v1421, %v1241
      %v1424 = vmin.f32 %v1422, %v1243
      %v1425 = vmin.f32 %v1423, %v1245
      %v1426 = vmin.f32 %v1424, %v1247
      %v1427 = vmin.f32 %v1425, %v1249
      %v1428 = vmin.f32 %v1426, %v1251
      %v1429 = vmin.f32 %v1427, %v1253
      %v1430 = vmin.f32 %v1428, %v1255
      %v1431 = vmin.f32 %v1429, %v1257
      %v1432 = vmin.f32 %v1430, %v1259
      %v1433 = vmin.f32 %v1431, %v1261
      %v1434 = vmin.f32 %v1432, %v1263
      %v1435 = vmin.f32 %v1433, %v1265
      %v1436 = vmin.f32 %v1434, %v1267
      %v1437 = vmin.f32 %v1435, %v1269
      %v1438 = vmin.f32 %v1436, %v1271
      %v1439 = vmin.f32 %v1437, %v1273
      %v1440 = vmin.f32 %v1438, %v1275
      %v1441 = vmin.f32 %v1439, %v1277
      %v1442 = vmin.f32 %v1440, %v1279
      %v1443 = vmin.f32 %v1441, %v1442
      %v1444 = vrot.slane %v1443, 4
      %v1445 = vmin.f32 %v1443, %v1444
      %v1446 = vrot.slane %v1445, 2
      %v1447 = vmin.f32 %v1445, %v1446
      %v1448 = vrot.slane %v1447, 1
      %v1449 = vmin.f32 %v1447, %v1448
      %p1450 = scmp.eq.s32.totalorder %s22, 0
      // Predicated region
      $region29: #{chamfer_distance_l2.1} parent=27 // pred_check
        %p1451 = pneg %p1450
      $region30: #{chamfer_distance_l2.1} parent=27 // pred_check_branch
        %1453 = sbr.rel (%p1451) target = $region32
      $region31: #{chamfer_distance_l2.1} parent=27 // pred_region
        %vm1454 = vcmask 7168
        %1455 = vst.msk [vmem:[%s258] sm:$0xff] %vm1454, %v1282
        %1456 = vst.msk [vmem:[%s258 + $0x8] sm:$0xff] %vm1454, %v1285
        %1457 = vst.msk [vmem:[%s258 + $0x10] sm:$0xff] %vm1454, %v1288
        %1458 = vst.msk [vmem:[%s258 + $0x18] sm:$0xff] %vm1454, %v1291
        %1459 = vst.msk [vmem:[%s258 + $0x20] sm:$0xff] %vm1454, %v1294
        %1460 = vst.msk [vmem:[%s258 + $0x28] sm:$0xff] %vm1454, %v1297
        %1461 = vst.msk [vmem:[%s258 + $0x30] sm:$0xff] %vm1454, %v1300
        %1462 = vst.msk [vmem:[%s258 + $0x38] sm:$0xff] %vm1454, %v1303
        %1463 = vst.msk [vmem:[%s258 + $0x40] sm:$0xff] %vm1454, %v1306
        %1464 = vst.msk [vmem:[%s258 + $0x48] sm:$0xff] %vm1454, %v1309
        %1465 = vst.msk [vmem:[%s258 + $0x50] sm:$0xff] %vm1454, %v1312
        %1466 = vst.msk [vmem:[%s258 + $0x58] sm:$0xff] %vm1454, %v1315
        %1467 = vst.msk [vmem:[%s258 + $0x60] sm:$0xff] %vm1454, %v1318
        %1468 = vst.msk [vmem:[%s258 + $0x68] sm:$0xff] %vm1454, %v1321
        %1469 = vst.msk [vmem:[%s258 + $0x70] sm:$0xff] %vm1454, %v1324
        %1470 = vst.msk [vmem:[%s258 + $0x78] sm:$0xff] %vm1454, %v1327
        %1471 = vst.msk [vmem:[%s258 + $0x80] sm:$0xff] %vm1454, %v1330
        %1472 = vst.msk [vmem:[%s258 + $0x88] sm:$0xff] %vm1454, %v1333
        %1473 = vst.msk [vmem:[%s258 + $0x90] sm:$0xff] %vm1454, %v1336
        %1474 = vst.msk [vmem:[%s258 + $0x98] sm:$0xff] %vm1454, %v1339
        %1475 = vst.msk [vmem:[%s258 + $0xa0] sm:$0xff] %vm1454, %v1342
        %1476 = vst.msk [vmem:[%s258 + $0xa8] sm:$0xff] %vm1454, %v1345
        %1477 = vst.msk [vmem:[%s258 + $0xb0] sm:$0xff] %vm1454, %v1348
        %1478 = vst.msk [vmem:[%s258 + $0xb8] sm:$0xff] %vm1454, %v1351
        %1479 = vst.msk [vmem:[%s258 + $0xc0] sm:$0xff] %vm1454, %v1354
        %1480 = vst.msk [vmem:[%s258 + $0xc8] sm:$0xff] %vm1454, %v1357
        %1481 = vst.msk [vmem:[%s258 + $0xd0] sm:$0xff] %vm1454, %v1360
        %1482 = vst.msk [vmem:[%s258 + $0xd8] sm:$0xff] %vm1454, %v1363
        %1483 = vst.msk [vmem:[%s258 + $0xe0] sm:$0xff] %vm1454, %v1366
        %1484 = vst.msk [vmem:[%s258 + $0xe8] sm:$0xff] %vm1454, %v1369
        %1485 = vst.msk [vmem:[%s258 + $0xf0] sm:$0xff] %vm1454, %v1372
        %1486 = vst.msk [vmem:[%s258 + $0xf8] sm:$0xff] %vm1454, %v1375
      $region32: #{chamfer_distance_l2.1} parent=27 // pred_fallthru
        _
      %p1487 = scmp.gt.s32.totalorder %s22, 0
      // Predicated region
      $region33: #{chamfer_distance_l2.1} parent=27 // pred_check
        %p1488 = pneg %p1487
      $region34: #{chamfer_distance_l2.1} parent=27 // pred_check_branch
        %1490 = sbr.rel (%p1488) target = $region36
      $region35: #{chamfer_distance_l2.1} parent=27 // pred_region
        %v1491 = vld [vmem:[%s258] sm:$0xff]
        %v1492 = vld [vmem:[%s258 + $0x8] sm:$0xff]
        %v1493 = vld [vmem:[%s258 + $0x10] sm:$0xff]
        %v1494 = vld [vmem:[%s258 + $0x18] sm:$0xff]
        %v1495 = vld [vmem:[%s258 + $0x20] sm:$0xff]
        %v1496 = vld [vmem:[%s258 + $0x28] sm:$0xff]
        %v1497 = vld [vmem:[%s258 + $0x30] sm:$0xff]
        %v1498 = vld [vmem:[%s258 + $0x38] sm:$0xff]
        %v1499 = vld [vmem:[%s258 + $0x40] sm:$0xff]
        %v1500 = vld [vmem:[%s258 + $0x48] sm:$0xff]
        %v1501 = vld [vmem:[%s258 + $0x50] sm:$0xff]
        %v1502 = vld [vmem:[%s258 + $0x58] sm:$0xff]
        %v1503 = vld [vmem:[%s258 + $0x60] sm:$0xff]
        %v1504 = vld [vmem:[%s258 + $0x68] sm:$0xff]
        %v1505 = vld [vmem:[%s258 + $0x70] sm:$0xff]
        %v1506 = vld [vmem:[%s258 + $0x78] sm:$0xff]
        %v1507 = vld [vmem:[%s258 + $0x80] sm:$0xff]
        %v1508 = vld [vmem:[%s258 + $0x88] sm:$0xff]
        %v1509 = vld [vmem:[%s258 + $0x90] sm:$0xff]
        %v1510 = vld [vmem:[%s258 + $0x98] sm:$0xff]
        %v1511 = vld [vmem:[%s258 + $0xa0] sm:$0xff]
        %v1512 = vld [vmem:[%s258 + $0xa8] sm:$0xff]
        %v1513 = vld [vmem:[%s258 + $0xb0] sm:$0xff]
        %v1514 = vld [vmem:[%s258 + $0xb8] sm:$0xff]
        %v1515 = vld [vmem:[%s258 + $0xc0] sm:$0xff]
        %v1516 = vld [vmem:[%s258 + $0xc8] sm:$0xff]
        %v1517 = vld [vmem:[%s258 + $0xd0] sm:$0xff]
        %v1518 = vld [vmem:[%s258 + $0xd8] sm:$0xff]
        %v1519 = vld [vmem:[%s258 + $0xe0] sm:$0xff]
        %v1520 = vld [vmem:[%s258 + $0xe8] sm:$0xff]
        %v1521 = vld [vmem:[%s258 + $0xf0] sm:$0xff]
        %v1522 = vld [vmem:[%s258 + $0xf8] sm:$0xff]
        %v1523 = vmin.f32 %v1491, %v1282
        %v1524 = vmin.f32 %v1492, %v1285
        %v1525 = vmin.f32 %v1493, %v1288
        %v1526 = vmin.f32 %v1494, %v1291
        %v1527 = vmin.f32 %v1495, %v1294
        %v1528 = vmin.f32 %v1496, %v1297
        %v1529 = vmin.f32 %v1497, %v1300
        %v1530 = vmin.f32 %v1498, %v1303
        %v1531 = vmin.f32 %v1499, %v1306
        %v1532 = vmin.f32 %v1500, %v1309
        %v1533 = vmin.f32 %v1501, %v1312
        %v1534 = vmin.f32 %v1502, %v1315
        %v1535 = vmin.f32 %v1503, %v1318
        %v1536 = vmin.f32 %v1504, %v1321
        %v1537 = vmin.f32 %v1505, %v1324
        %v1538 = vmin.f32 %v1506, %v1327
        %v1539 = vmin.f32 %v1507, %v1330
        %v1540 = vmin.f32 %v1508, %v1333
        %v1541 = vmin.f32 %v1509, %v1336
        %v1542 = vmin.f32 %v1510, %v1339
        %v1543 = vmin.f32 %v1511, %v1342
        %v1544 = vmin.f32 %v1512, %v1345
        %v1545 = vmin.f32 %v1513, %v1348
        %v1546 = vmin.f32 %v1514, %v1351
        %v1547 = vmin.f32 %v1515, %v1354
        %v1548 = vmin.f32 %v1516, %v1357
        %v1549 = vmin.f32 %v1517, %v1360
        %v1550 = vmin.f32 %v1518, %v1363
        %v1551 = vmin.f32 %v1519, %v1366
        %v1552 = vmin.f32 %v1520, %v1369
        %v1553 = vmin.f32 %v1521, %v1372
        %v1554 = vmin.f32 %v1522, %v1375
        %vm1555 = vcmask 7168
        %1556 = vst.msk [vmem:[%s258] sm:$0xff] %vm1555, %v1523
        %1557 = vst.msk [vmem:[%s258 + $0x8] sm:$0xff] %vm1555, %v1524
        %1558 = vst.msk [vmem:[%s258 + $0x10] sm:$0xff] %vm1555, %v1525
        %1559 = vst.msk [vmem:[%s258 + $0x18] sm:$0xff] %vm1555, %v1526
        %1560 = vst.msk [vmem:[%s258 + $0x20] sm:$0xff] %vm1555, %v1527
        %1561 = vst.msk [vmem:[%s258 + $0x28] sm:$0xff] %vm1555, %v1528
        %1562 = vst.msk [vmem:[%s258 + $0x30] sm:$0xff] %vm1555, %v1529
        %1563 = vst.msk [vmem:[%s258 + $0x38] sm:$0xff] %vm1555, %v1530
        %1564 = vst.msk [vmem:[%s258 + $0x40] sm:$0xff] %vm1555, %v1531
        %1565 = vst.msk [vmem:[%s258 + $0x48] sm:$0xff] %vm1555, %v1532
        %1566 = vst.msk [vmem:[%s258 + $0x50] sm:$0xff] %vm1555, %v1533
        %1567 = vst.msk [vmem:[%s258 + $0x58] sm:$0xff] %vm1555, %v1534
        %1568 = vst.msk [vmem:[%s258 + $0x60] sm:$0xff] %vm1555, %v1535
        %1569 = vst.msk [vmem:[%s258 + $0x68] sm:$0xff] %vm1555, %v1536
        %1570 = vst.msk [vmem:[%s258 + $0x70] sm:$0xff] %vm1555, %v1537
        %1571 = vst.msk [vmem:[%s258 + $0x78] sm:$0xff] %vm1555, %v1538
        %1572 = vst.msk [vmem:[%s258 + $0x80] sm:$0xff] %vm1555, %v1539
        %1573 = vst.msk [vmem:[%s258 + $0x88] sm:$0xff] %vm1555, %v1540
        %1574 = vst.msk [vmem:[%s258 + $0x90] sm:$0xff] %vm1555, %v1541
        %1575 = vst.msk [vmem:[%s258 + $0x98] sm:$0xff] %vm1555, %v1542
        %1576 = vst.msk [vmem:[%s258 + $0xa0] sm:$0xff] %vm1555, %v1543
        %1577 = vst.msk [vmem:[%s258 + $0xa8] sm:$0xff] %vm1555, %v1544
        %1578 = vst.msk [vmem:[%s258 + $0xb0] sm:$0xff] %vm1555, %v1545
        %1579 = vst.msk [vmem:[%s258 + $0xb8] sm:$0xff] %vm1555, %v1546
        %1580 = vst.msk [vmem:[%s258 + $0xc0] sm:$0xff] %vm1555, %v1547
        %1581 = vst.msk [vmem:[%s258 + $0xc8] sm:$0xff] %vm1555, %v1548
        %1582 = vst.msk [vmem:[%s258 + $0xd0] sm:$0xff] %vm1555, %v1549
        %1583 = vst.msk [vmem:[%s258 + $0xd8] sm:$0xff] %vm1555, %v1550
        %1584 = vst.msk [vmem:[%s258 + $0xe0] sm:$0xff] %vm1555, %v1551
        %1585 = vst.msk [vmem:[%s258 + $0xe8] sm:$0xff] %vm1555, %v1552
        %1586 = vst.msk [vmem:[%s258 + $0xf0] sm:$0xff] %vm1555, %v1553
        %1587 = vst.msk [vmem:[%s258 + $0xf8] sm:$0xff] %vm1555, %v1554
      $region36: #{chamfer_distance_l2.1} parent=27 // pred_fallthru
        _
      %s1588 = smul.u32 %s22, 256
      %p1589 = scmp.eq.s32.totalorder %s21, 0
      // Predicated region
      $region37: #{chamfer_distance_l2.1} parent=27 // pred_check
        %p1590 = pneg %p1589
      $region38: #{chamfer_distance_l2.1} parent=27 // pred_check_branch
        %1592 = sbr.rel (%p1590) target = $region40
      $region39: #{chamfer_distance_l2.1} parent=27 // pred_region
        %v1595 = vcombine.low %v1412, %v1449
        %v1597 = vunpack.c.l.s4 1966171168
        %v1598 = vunpack.c.0.s8 %v1597
        %v1599 = vlaneseq
        %v1600 = vshrl.u32 %v1599, 7
        %v1601 = vsub.s32 %v1598, %v1600
        %v1602 = vrot.slane %v1595, %v1601
        %v1604 = vunpack.c.l.s4 1966171168
        %v1605 = vunpack.c.0.s8 %v1604
        %v1606 = vlaneseq
        %v1607 = vshrl.u32 %v1606, 7
        %v1608 = vsub.s32 %v1605, %v1607
        %v1609 = vrot.slane %v1602, %v1608
        %s1611 = sshra.s32 %s1588, 7
        %s1612 = sand.u32 %s1588, 127
        %s1613 = scalar_lea.vmem %s263, %s1611
        %v1614 = vlaneseq
        %vm1615 = vcmp.ge.s32.totalorder %v1614, 0
        %vm1616 = vcmp.lt.s32.totalorder %v1614, 256
        %vm1617 = vmand %vm1615, %vm1616
        %1618 = vst.msk [vmem:[%s1613] sm:$0x3] %vm1617, %v1609
      $region40: #{chamfer_distance_l2.1} parent=27 // pred_fallthru
        _
      %p1619 = scmp.gt.s32.totalorder %s21, 0
      // Predicated region
      $region41: #{chamfer_distance_l2.1} parent=27 // pred_check
        %p1620 = pneg %p1619
      $region42: #{chamfer_distance_l2.1} parent=27 // pred_check_branch
        %1622 = sbr.rel (%p1620) target = $region44
      $region43: #{chamfer_distance_l2.1} parent=27 // pred_region
        %s1623 = sshra.s32 %s1588, 7
        %s1624 = sand.u32 %s1588, 127
        %s1625 = scalar_lea.vmem %s263, %s1623
        %v1626 = vld [vmem:[%s1625] sm:$0x3]
        %v1629 = vcombine.low %v1412, %v1449
        %v1631 = vunpack.c.l.s4 1966171168
        %v1632 = vunpack.c.0.s8 %v1631
        %v1633 = vlaneseq
        %v1634 = vshrl.u32 %v1633, 7
        %v1635 = vsub.s32 %v1632, %v1634
        %v1636 = vrot.slane %v1629, %v1635
        %v1638 = vunpack.c.l.s4 1966171168
        %v1639 = vunpack.c.0.s8 %v1638
        %v1640 = vlaneseq
        %v1641 = vshrl.u32 %v1640, 7
        %v1642 = vsub.s32 %v1639, %v1641
        %v1643 = vrot.slane %v1636, %v1642
        %v1645 = vmin.f32 %v1626, %v1643
        %v1646 = vlaneseq
        %vm1647 = vcmp.ge.s32.totalorder %v1646, 0
        %vm1648 = vcmp.lt.s32.totalorder %v1646, 256
        %vm1649 = vmand %vm1647, %vm1648
        %1650 = vst.msk [vmem:[%s1625] sm:$0x3] %vm1649, %v1645
      $region44: #{chamfer_distance_l2.1} parent=27 // pred_fallthru
        _
      %s1651 = smul.u32 32, %s21
      %p1652 = scmp.lt.s32.totalorder %s20, 1
      %s1653 = scalar_select %p1652, %s20, 1
      %p1654 = scmp.lt.s32.totalorder %s1651, 31
      %s1655 = scalar_select %p1654, %s1651, 31
      %s1656 = smul.addr %s1653, 32
      %s1657 = sadd.s32 %s1655, %s1656
      %s1658 = smul.addr %s1657, 8
      %s1659 = scalar_lea.vmem %s2, %s1658
      %p1660 = scmp.lt.s32.totalorder %s20, 1
      %s1661 = scalar_select %p1660, %s20, 1
      %s1662 = smul.addr %s1661, 2
      %s1663 = scalar_lea.vmem %s3, %s1662
      // Predicated region
      $region45: #{chamfer_distance_l2.1} parent=27 // pred_check
        %p1664 = pneg %p110
      $region46: #{chamfer_distance_l2.1} parent=27 // pred_check_branch
        %1666 = sbr.rel (%p1664) target = $region48
      $region47: #{chamfer_distance_l2.1} parent=27 // pred_region
        %s1667 = smul.u32 32, %s21
      $region48: #{chamfer_distance_l2.1} parent=27 // pred_fallthru
        _
      // Predicated region
      $region49: #{chamfer_distance_l2.1} parent=27 // pred_check
        %p1668 = pneg %p136
      $region50: #{chamfer_distance_l2.1} parent=27 // pred_check_branch
        %1670 = sbr.rel (%p1668) target = $region52
      $region51: #{chamfer_distance_l2.1} parent=27 // pred_region
        _
      $region52: #{chamfer_distance_l2.1} parent=27 // pred_fallthru
        _
    $region28: #{chamfer_distance_l2.1} parent=5 // pred_fallthru
      _
    %p1671 = scmp.le.s32.totalorder 2, %s10
    // Predicated region
    $region53: #{chamfer_distance_l2.1} parent=5 // pred_check
      %p1672 = pneg %p1671
    $region54: #{chamfer_distance_l2.1} parent=5 // pred_check_branch
      %1674 = sbr.rel (%p1672) target = $region56
    $region55: #{chamfer_distance_l2.1} parent=5 // pred_region
      %s1675 = ssub.s32 %s10, 2
      // Predicated region
      $region57: #{chamfer_distance_l2.1} parent=55 // pred_check
        %p1676 = pneg %p116
      $region58: #{chamfer_distance_l2.1} parent=55 // pred_check_branch
        %1678 = sbr.rel (%p1676) target = $region60
      $region59: #{chamfer_distance_l2.1} parent=55 // pred_region
        %s1679 = smul.u32 32, %s24
        %p1680 = scmp.lt.s32.totalorder %s23, 1
        %s1681 = scalar_select %p1680, %s23, 1
        %p1682 = scmp.lt.s32.totalorder %s1679, 31
        %s1683 = scalar_select %p1682, %s1679, 31
        %s1684 = smul.addr %s1681, 32
        %s1685 = sadd.s32 %s1683, %s1684
        %s1686 = smul.addr %s1685, 8
        %s1687 = scalar_lea.vmem %s2, %s1686
      $region60: #{chamfer_distance_l2.1} parent=55 // pred_fallthru
        _
      // Predicated region
      $region61: #{chamfer_distance_l2.1} parent=55 // pred_check
        %p1688 = pneg %p142
      $region62: #{chamfer_distance_l2.1} parent=55 // pred_check_branch
        %1690 = sbr.rel (%p1688) target = $region64
      $region63: #{chamfer_distance_l2.1} parent=55 // pred_region
        %p1691 = scmp.lt.s32.totalorder %s23, 1
        %s1692 = scalar_select %p1691, %s23, 1
        %s1693 = smul.addr %s1692, 2
        %s1694 = scalar_lea.vmem %s3, %s1693
      $region64: #{chamfer_distance_l2.1} parent=55 // pred_fallthru
        _
    $region56: #{chamfer_distance_l2.1} parent=5 // pred_fallthru
      _
  $region6: #{chamfer_distance_l2.1} parent=0 // loop_footer
    %s14 = sadd.s32 1, %s10
  $region7: #{chamfer_distance_l2.1} parent=0 // loop_footer_branch
    %9 = sbr.rel target = $region3
  $region8: #{chamfer_distance_l2.1} parent=0 // loop_exit
    _

</llo_original>
